<compile_context>
chip_gen: v5e
topology: v5e:2x2
jax: 0.10.0
libtpu: 0.0.40
codegen_flags: <defaults>
</compile_context>

<pallas_src>
import functools

import jax
import jax.numpy as jnp
from jax import lax
from jax.experimental import pallas as pl
from jax.experimental.pallas import tpu as pltpu


def _round_up(a, b):
    return (a + b - 1) // b * b


# ---------------------------------------------------------------------------
# Pallas kernel: one width strip (one batch element) per grid step.
#   For each row band of tb output rows:
#     acc  = sum_{dy=0..8}  strip[r0+dy : r0+dy+tb, :] @ Wtoe[dy]   (MXU, bf16->f32)
#     act  = relu(acc + branch_bias)                                (f32 VPU)
#     out  = relu(act @ Wa_blockdiag + ba)                          (MXU f32)
#   -> lane-dense (tb, Wt) f32 store.
# ---------------------------------------------------------------------------
def _mcnn_strip_kernel(x_ref, wtoe_ref, bb_ref, wa_ref, ba_ref, o_ref, *,
                       tb, n_bands):
    # x_ref:    (1, 1, Hpad+8, (Wt+8)*Cin)  bf16  input strip (with halos)
    # wtoe_ref: (9, (Wt+8)*Cin, Wt*30)      bf16  row-Toeplitz branch weights
    # bb_ref:   (1, Wt*30)                  f32   branch bias tiled over width
    # wa_ref:   (Wt*30, Wt)                 f32   COV_ALL 1x1 weight, block-diag
    # ba_ref:   (1, 1)                      f32   COV_ALL bias (SMEM scalar)
    # o_ref:    (1, 1, Hpad, Wt)            f32   lane-dense output strip
    ba = ba_ref[0, 0]
    for b in range(n_bands):              # static, unrolled: ~8k pixels / band
        r0 = b * tb
        acc = None
        for dy in range(9):                # 9 row taps = 9 shifted-slab matmuls
            slab = x_ref[0, 0, r0 + dy:r0 + dy + tb, :]          # (tb, Wc) view
            part = jnp.dot(slab, wtoe_ref[dy],
                           preferred_element_type=jnp.float32)    # (tb, Wt*30)
            acc = part if acc is None else acc + part
        # Branch bias + ReLU, all in f32 (v5e-safe epilogue).
        act = jnp.maximum(acc + bb_ref[...], 0.0)                 # (tb, Wt*30)
        # COV_ALL 1x1 conv (30 -> 1), fused as a block-diagonal MXU matmul so
        # the 30-channel activation never leaves VMEM.
        d = jnp.dot(act, wa_ref[...],
                    preferred_element_type=jnp.float32) + ba      # (tb, Wt)
        o_ref[0, 0, r0:r0 + tb, :] = jnp.maximum(d, 0.0)          # lane-dense


def _mcnn_pallas(x_strips, wtoe, bb_t, wa_bd, ba, *, tb, n_bands, h_out):
    n, nwt, hin, wc = x_strips.shape
    _, _, kn = wtoe.shape
    wt = wa_bd.shape[1]

    kernel = functools.partial(_mcnn_strip_kernel, tb=tb, n_bands=n_bands)
    return pl.pallas_call(
        kernel,
        out_shape=jax.ShapeDtypeStruct((n, nwt, h_out, wt), jnp.float32),
        grid_spec=pltpu.PrefetchScalarGridSpec(
            num_scalar_prefetch=0,
            grid=(n, nwt),                      # both parallel -> v7x megacore
            in_specs=[
                # One full width strip per step (auto double-buffered).
                pl.BlockSpec((1, 1, hin, wc), lambda i, j: (i, j, 0, 0)),
                # Resident weights / bias.
                pl.BlockSpec((9, wc, kn), lambda i, j: (0, 0, 0)),
                pl.BlockSpec((1, kn), lambda i, j: (0, 0)),
                pl.BlockSpec((kn, wt), lambda i, j: (0, 0)),
                # COV_ALL bias: a single scalar, kept in SMEM.
                pl.BlockSpec(memory_space=pltpu.MemorySpace.SMEM),
            ],
            out_specs=pl.BlockSpec((1, 1, h_out, wt), lambda i, j: (i, j, 0, 0)),
        ),
        compiler_params=pltpu.CompilerParams(
            dimension_semantics=("parallel", "parallel"),
            # Explicit limit: v5e's scoped-VMEM default is only 16 MiB.
            vmem_limit_bytes=32 * 1024 * 1024,
        ),
    )(x_strips, wtoe, bb_t, wa_bd, ba)


# ---------------------------------------------------------------------------
# Weight preparation (wrapper side, tiny tensors).
# ---------------------------------------------------------------------------
def _fuse_branch_weights(params):
    """Zero-pad 7x7/5x5 kernels to a 9x9 footprint and concat along Cout."""
    wl = params["w_L"]                                              # (9,9,Cin, 8)
    wm = jnp.pad(params["w_M"], ((1, 1), (1, 1), (0, 0), (0, 0)))   # 7x7 -> 9x9
    ws = jnp.pad(params["w_S"], ((2, 2), (2, 2), (0, 0), (0, 0)))   # 5x5 -> 9x9
    wfull = jnp.concatenate([wl, wm, ws], axis=-1)                  # (9,9,Cin,30)
    bb = jnp.concatenate([params["b_L"], params["b_M"], params["b_S"]])  # (30,)
    return wfull, bb


def _make_row_toeplitz(wfull, wt):
    """Wtoe[dy, u*Cin+ci, x*30+co] = wfull[dy, u-x, ci, co] if 0<=u-x<9 else 0."""
    _, _, cin, cout = wfull.shape
    u = jnp.arange(wt + 8)
    x = jnp.arange(wt)
    dx = u[:, None] - x[None, :]                         # (Wt+8, Wt)
    valid = (dx >= 0) & (dx < 9)
    g = jnp.take(wfull, jnp.clip(dx, 0, 8), axis=1)      # (9, Wt+8, Wt, Cin, 30)
    g = jnp.where(valid[None, :, :, None, None], g, 0.0)
    g = jnp.transpose(g, (0, 1, 3, 2, 4))                # (9, Wt+8, Cin, Wt, 30)
    return g.reshape(9, (wt + 8) * cin, wt * cout)


_TARGET_PX_PER_BAND = 8192    # review: ~4k-8k pixels per inner band


def _pick_tiles(h, w):
    wt = w if w <= 64 else 64                 # width-strip size (lanes of output)
    wpad = _round_up(w, wt)
    nwt = wpad // wt
    tb = max(8, (_TARGET_PX_PER_BAND // wt) // 8 * 8)
    tb = min(tb, _round_up(h, 8))             # tb always a multiple of 8
    hpad = _round_up(h, tb)
    n_bands = hpad // tb
    return wt, wpad, nwt, tb, hpad, n_bands


# ---------------------------------------------------------------------------
# Mcnn forward.
# ---------------------------------------------------------------------------
def init_params(key, cin=1):
    specs = {"L": (9, 8), "M": (7, 10), "S": (5, 12)}   # kernel size, out channels
    params = {}
    keys = jax.random.split(key, 2 * len(specs) + 2)
    i = 0
    for name, (k, co) in specs.items():
        fan_in = k * k * cin
        params[f"w_{name}"] = (jax.random.normal(keys[i], (k, k, cin, co),
                                                 jnp.float32)
                               * (1.0 / jnp.sqrt(fan_in)))
        params[f"b_{name}"] = (jax.random.normal(keys[i + 1], (co,),
                                                 jnp.float32) * 0.01)
        i += 2
    # COV_ALL: Conv2d(30 -> 1, kernel 1) + ReLU (reproduced exactly).
    params["w_all"] = (jax.random.normal(keys[i], (1, 1, 30, 1), jnp.float32)
                       * (1.0 / jnp.sqrt(30.0)))
    params["b_all"] = jax.random.normal(keys[i + 1], (1,), jnp.float32) * 0.01
    return params


@jax.jit
def mcnn_forward(params, x_nchw):
    n, cin, h, w = x_nchw.shape
    wt, wpad, nwt, tb, hpad, n_bands = _pick_tiles(h, w)

    wfull, bb = _fuse_branch_weights(params)
    wa = params["w_all"].reshape(30).astype(jnp.float32)
    ba = params["b_all"].reshape(1, 1).astype(jnp.float32)

    # Row-Toeplitz branch weights (bf16), width-tiled bias, block-diag COV_ALL.
    wtoe = _make_row_toeplitz(wfull, wt).astype(jnp.bfloat16)   # (9, Wc, Wt*30)
    bb_t = jnp.tile(bb, wt).reshape(1, wt * 30).astype(jnp.float32)
    wa_bd = jnp.kron(jnp.eye(wt, dtype=jnp.float32), wa.reshape(30, 1))

    # NCHW -> NHWC, bf16; zero-pad: 4-pixel conv halo + bottom/right alignment.
    # This only touches ~input-sized data (no 81x im2col in HBM).
    x = jnp.transpose(x_nchw, (0, 2, 3, 1)).astype(jnp.bfloat16)
    x = jnp.pad(x, ((0, 0), (4, 4 + hpad - h), (4, 4 + wpad - w), (0, 0)))

    # Width strips with an 8-column halo -- the only materialized intermediate
    # (~(Wt+8)/Wt extra bytes).  TODO(synk): pl.ANY + manual halo DMA to shave
    # the last ~12%.
    strips = [x[:, :, j * wt:j * wt + wt + 8, :] for j in range(nwt)]
    x_strips = jnp.stack(strips, axis=1)                        # (N,nwt,Hin,Wt+8,Cin)
    x_strips = x_strips.reshape(n, nwt, hpad + 8, (wt + 8) * cin)

    out = _mcnn_pallas(x_strips, wtoe, bb_t, wa_bd, ba,
                       tb=tb, n_bands=n_bands, h_out=hpad)      # (N,nwt,Hpad,Wt)
    out = jnp.transpose(out, (0, 2, 1, 3)).reshape(n, hpad, wpad)
    return out[:, :h, :w][:, None, :, :]                        # NCHW (N,1,H,W)


# ---------------------------------------------------------------------------
# Pure-JAX reference (same bf16 quantization of inputs/weights, f32 math).
# ---------------------------------------------------------------------------
def _reference_forward(params, x_nchw):
    wfull, bb = _fuse_branch_weights(params)
    wfull = wfull.astype(jnp.bfloat16).astype(jnp.float32)
    wa = params["w_all"].reshape(30).astype(jnp.float32)
    ba = params["b_all"].reshape(()).astype(jnp.float32)
    x = jnp.transpose(x_nchw, (0, 2, 3, 1)).astype(jnp.bfloat16).astype(jnp.float32)
    act = lax.conv_general_dilated(
        x, wfull, window_strides=(1, 1), padding="SAME",
        dimension_numbers=("NHWC", "HWIO", "NHWC"),
        precision=lax.Precision.HIGHEST)
    act = jnp.maximum(act + bb, 0.0)
    out = jnp.maximum(
        jnp.einsum("nhwc,c->nhw", act, wa, precision=lax.Precision.HIGHEST) + ba,
        0.0)
    return out[:, None, :, :]


if __name__ == "__main__":
    key = jax.random.PRNGKey(0)
    k_params, k_input = jax.random.split(key)

    params = init_params(k_params, cin=1)
    # PyTorch conv input convention NCHW: [batch=2, channels=1, 16, 16]
    x = jax.random.normal(k_input, (2, 1, 16, 16), jnp.float32)

    y = mcnn_forward(params, x)
    jax.block_until_ready(y)

    assert y.shape == (2, 1, 16, 16), y.shape
    assert y.dtype == jnp.float32
    assert bool(jnp.all(y >= 0.0))          # final ReLU

    y_ref = _reference_forward(params, x)
    max_err = float(jnp.max(jnp.abs(y - y_ref)))
    assert max_err < 5e-3, f"max abs err vs reference: {max_err}"

    print("KERNEL_OK")
</pallas_src>

<mosaic_0001>
module attributes {stable_mosaic.version = 11 : i64} {
  func.func @_mcnn_strip_kernel(%arg0: i32, %arg1: i32, %arg2: memref<1x1x24x24xbf16, #tpu.memory_space<vmem>>, %arg3: memref<9x24x480xbf16, #tpu.memory_space<vmem>>, %arg4: memref<1x480xf32, #tpu.memory_space<vmem>>, %arg5: memref<480x16xf32, #tpu.memory_space<vmem>>, %arg6: memref<1x1xf32, #tpu.memory_space<smem>>, %arg7: memref<1x1x16x16xf32, #tpu.memory_space<vmem>>) attributes {dimension_semantics = [#tpu.dimension_semantics<parallel>, #tpu.dimension_semantics<parallel>], iteration_bounds = array<i64: 2, 1>, scalar_prefetch = 0 : i64, scratch_operands = 0 : i64, tpu.core_type = #tpu.core_type<tc>, window_params = [{transform_indices = @transform_0, window_bounds = array<i64: 1, 1, 24, 24>}, {pipeline_mode = #tpu.pipeline_mode<synchronous>, transform_indices = @transform_1, window_bounds = array<i64: 9, 24, 480>}, {pipeline_mode = #tpu.pipeline_mode<synchronous>, transform_indices = @transform_2, window_bounds = array<i64: 1, 480>}, {pipeline_mode = #tpu.pipeline_mode<synchronous>, transform_indices = @transform_3, window_bounds = array<i64: 480, 16>}, {transform_indices = @transform_4, window_bounds = array<i64: 1, 1>}, {transform_indices = @transform_5, window_bounds = array<i64: 1, 1, 16, 16>}]} {
    %c0 = arith.constant 0 : index
    %c0_0 = arith.constant 0 : index
    %0 = memref.load %arg6[%c0, %c0_0] : memref<1x1xf32, #tpu.memory_space<smem>>
    %c0_1 = arith.constant 0 : index
    %c0_2 = arith.constant 0 : index
    %c0_3 = arith.constant 0 : index
    %c0_4 = arith.constant 0 : index
    %1 = vector.load %arg2[%c0_1, %c0_2, %c0_3, %c0_4] : memref<1x1x24x24xbf16, #tpu.memory_space<vmem>>, vector<1x1x16x24xbf16>
    %2 = vector.shape_cast %1 : vector<1x1x16x24xbf16> to vector<16x24xbf16>
    %c0_5 = arith.constant 0 : index
    %c0_6 = arith.constant 0 : index
    %c0_7 = arith.constant 0 : index
    %3 = vector.load %arg3[%c0_5, %c0_6, %c0_7] : memref<9x24x480xbf16, #tpu.memory_space<vmem>>, vector<1x24x480xbf16>
    %4 = vector.shape_cast %3 : vector<1x24x480xbf16> to vector<24x480xbf16>
    %cst = arith.constant dense<0.000000e+00> : vector<16x480xf32>
    %5 = tpu.matmul %2, %4, %cst {dimension_numbers = #tpu.dot_dimension_numbers<[1], [0], [0], [1], [0, 0, 1, 1], [], []>} : vector<16x24xbf16>, vector<24x480xbf16>, vector<16x480xf32> -> vector<16x480xf32>
    %c0_8 = arith.constant 0 : index
    %c0_9 = arith.constant 0 : index
    %c1 = arith.constant 1 : index
    %c0_10 = arith.constant 0 : index
    %6 = vector.load %arg2[%c0_8, %c0_9, %c1, %c0_10] : memref<1x1x24x24xbf16, #tpu.memory_space<vmem>>, vector<1x1x16x24xbf16>
    %7 = vector.shape_cast %6 : vector<1x1x16x24xbf16> to vector<16x24xbf16>
    %c1_11 = arith.constant 1 : index
    %c0_12 = arith.constant 0 : index
    %c0_13 = arith.constant 0 : index
    %8 = vector.load %arg3[%c1_11, %c0_12, %c0_13] : memref<9x24x480xbf16, #tpu.memory_space<vmem>>, vector<1x24x480xbf16>
    %9 = vector.shape_cast %8 : vector<1x24x480xbf16> to vector<24x480xbf16>
    %cst_14 = arith.constant dense<0.000000e+00> : vector<16x480xf32>
    %10 = tpu.matmul %7, %9, %cst_14 {dimension_numbers = #tpu.dot_dimension_numbers<[1], [0], [0], [1], [0, 0, 1, 1], [], []>} : vector<16x24xbf16>, vector<24x480xbf16>, vector<16x480xf32> -> vector<16x480xf32>
    %11 = arith.addf %5, %10 : vector<16x480xf32>
    %c0_15 = arith.constant 0 : index
    %c0_16 = arith.constant 0 : index
    %c2 = arith.constant 2 : index
    %c0_17 = arith.constant 0 : index
    %12 = vector.load %arg2[%c0_15, %c0_16, %c2, %c0_17] : memref<1x1x24x24xbf16, #tpu.memory_space<vmem>>, vector<1x1x16x24xbf16>
    %13 = vector.shape_cast %12 : vector<1x1x16x24xbf16> to vector<16x24xbf16>
    %c2_18 = arith.constant 2 : index
    %c0_19 = arith.constant 0 : index
    %c0_20 = arith.constant 0 : index
    %14 = vector.load %arg3[%c2_18, %c0_19, %c0_20] : memref<9x24x480xbf16, #tpu.memory_space<vmem>>, vector<1x24x480xbf16>
    %15 = vector.shape_cast %14 : vector<1x24x480xbf16> to vector<24x480xbf16>
    %cst_21 = arith.constant dense<0.000000e+00> : vector<16x480xf32>
    %16 = tpu.matmul %13, %15, %cst_21 {dimension_numbers = #tpu.dot_dimension_numbers<[1], [0], [0], [1], [0, 0, 1, 1], [], []>} : vector<16x24xbf16>, vector<24x480xbf16>, vector<16x480xf32> -> vector<16x480xf32>
    %17 = arith.addf %11, %16 : vector<16x480xf32>
    %c0_22 = arith.constant 0 : index
    %c0_23 = arith.constant 0 : index
    %c3 = arith.constant 3 : index
    %c0_24 = arith.constant 0 : index
    %18 = vector.load %arg2[%c0_22, %c0_23, %c3, %c0_24] : memref<1x1x24x24xbf16, #tpu.memory_space<vmem>>, vector<1x1x16x24xbf16>
    %19 = vector.shape_cast %18 : vector<1x1x16x24xbf16> to vector<16x24xbf16>
    %c3_25 = arith.constant 3 : index
    %c0_26 = arith.constant 0 : index
    %c0_27 = arith.constant 0 : index
    %20 = vector.load %arg3[%c3_25, %c0_26, %c0_27] : memref<9x24x480xbf16, #tpu.memory_space<vmem>>, vector<1x24x480xbf16>
    %21 = vector.shape_cast %20 : vector<1x24x480xbf16> to vector<24x480xbf16>
    %cst_28 = arith.constant dense<0.000000e+00> : vector<16x480xf32>
    %22 = tpu.matmul %19, %21, %cst_28 {dimension_numbers = #tpu.dot_dimension_numbers<[1], [0], [0], [1], [0, 0, 1, 1], [], []>} : vector<16x24xbf16>, vector<24x480xbf16>, vector<16x480xf32> -> vector<16x480xf32>
    %23 = arith.addf %17, %22 : vector<16x480xf32>
    %c0_29 = arith.constant 0 : index
    %c0_30 = arith.constant 0 : index
    %c4 = arith.constant 4 : index
    %c0_31 = arith.constant 0 : index
    %24 = vector.load %arg2[%c0_29, %c0_30, %c4, %c0_31] : memref<1x1x24x24xbf16, #tpu.memory_space<vmem>>, vector<1x1x16x24xbf16>
    %25 = vector.shape_cast %24 : vector<1x1x16x24xbf16> to vector<16x24xbf16>
    %c4_32 = arith.constant 4 : index
    %c0_33 = arith.constant 0 : index
    %c0_34 = arith.constant 0 : index
    %26 = vector.load %arg3[%c4_32, %c0_33, %c0_34] : memref<9x24x480xbf16, #tpu.memory_space<vmem>>, vector<1x24x480xbf16>
    %27 = vector.shape_cast %26 : vector<1x24x480xbf16> to vector<24x480xbf16>
    %cst_35 = arith.constant dense<0.000000e+00> : vector<16x480xf32>
    %28 = tpu.matmul %25, %27, %cst_35 {dimension_numbers = #tpu.dot_dimension_numbers<[1], [0], [0], [1], [0, 0, 1, 1], [], []>} : vector<16x24xbf16>, vector<24x480xbf16>, vector<16x480xf32> -> vector<16x480xf32>
    %29 = arith.addf %23, %28 : vector<16x480xf32>
    %c0_36 = arith.constant 0 : index
    %c0_37 = arith.constant 0 : index
    %c5 = arith.constant 5 : index
    %c0_38 = arith.constant 0 : index
    %30 = vector.load %arg2[%c0_36, %c0_37, %c5, %c0_38] : memref<1x1x24x24xbf16, #tpu.memory_space<vmem>>, vector<1x1x16x24xbf16>
    %31 = vector.shape_cast %30 : vector<1x1x16x24xbf16> to vector<16x24xbf16>
    %c5_39 = arith.constant 5 : index
    %c0_40 = arith.constant 0 : index
    %c0_41 = arith.constant 0 : index
    %32 = vector.load %arg3[%c5_39, %c0_40, %c0_41] : memref<9x24x480xbf16, #tpu.memory_space<vmem>>, vector<1x24x480xbf16>
    %33 = vector.shape_cast %32 : vector<1x24x480xbf16> to vector<24x480xbf16>
    %cst_42 = arith.constant dense<0.000000e+00> : vector<16x480xf32>
    %34 = tpu.matmul %31, %33, %cst_42 {dimension_numbers = #tpu.dot_dimension_numbers<[1], [0], [0], [1], [0, 0, 1, 1], [], []>} : vector<16x24xbf16>, vector<24x480xbf16>, vector<16x480xf32> -> vector<16x480xf32>
    %35 = arith.addf %29, %34 : vector<16x480xf32>
    %c0_43 = arith.constant 0 : index
    %c0_44 = arith.constant 0 : index
    %c6 = arith.constant 6 : index
    %c0_45 = arith.constant 0 : index
    %36 = vector.load %arg2[%c0_43, %c0_44, %c6, %c0_45] : memref<1x1x24x24xbf16, #tpu.memory_space<vmem>>, vector<1x1x16x24xbf16>
    %37 = vector.shape_cast %36 : vector<1x1x16x24xbf16> to vector<16x24xbf16>
    %c6_46 = arith.constant 6 : index
    %c0_47 = arith.constant 0 : index
    %c0_48 = arith.constant 0 : index
    %38 = vector.load %arg3[%c6_46, %c0_47, %c0_48] : memref<9x24x480xbf16, #tpu.memory_space<vmem>>, vector<1x24x480xbf16>
    %39 = vector.shape_cast %38 : vector<1x24x480xbf16> to vector<24x480xbf16>
    %cst_49 = arith.constant dense<0.000000e+00> : vector<16x480xf32>
    %40 = tpu.matmul %37, %39, %cst_49 {dimension_numbers = #tpu.dot_dimension_numbers<[1], [0], [0], [1], [0, 0, 1, 1], [], []>} : vector<16x24xbf16>, vector<24x480xbf16>, vector<16x480xf32> -> vector<16x480xf32>
    %41 = arith.addf %35, %40 : vector<16x480xf32>
    %c0_50 = arith.constant 0 : index
    %c0_51 = arith.constant 0 : index
    %c7 = arith.constant 7 : index
    %c0_52 = arith.constant 0 : index
    %42 = vector.load %arg2[%c0_50, %c0_51, %c7, %c0_52] : memref<1x1x24x24xbf16, #tpu.memory_space<vmem>>, vector<1x1x16x24xbf16>
    %43 = vector.shape_cast %42 : vector<1x1x16x24xbf16> to vector<16x24xbf16>
    %c7_53 = arith.constant 7 : index
    %c0_54 = arith.constant 0 : index
    %c0_55 = arith.constant 0 : index
    %44 = vector.load %arg3[%c7_53, %c0_54, %c0_55] : memref<9x24x480xbf16, #tpu.memory_space<vmem>>, vector<1x24x480xbf16>
    %45 = vector.shape_cast %44 : vector<1x24x480xbf16> to vector<24x480xbf16>
    %cst_56 = arith.constant dense<0.000000e+00> : vector<16x480xf32>
    %46 = tpu.matmul %43, %45, %cst_56 {dimension_numbers = #tpu.dot_dimension_numbers<[1], [0], [0], [1], [0, 0, 1, 1], [], []>} : vector<16x24xbf16>, vector<24x480xbf16>, vector<16x480xf32> -> vector<16x480xf32>
    %47 = arith.addf %41, %46 : vector<16x480xf32>
    %c0_57 = arith.constant 0 : index
    %c0_58 = arith.constant 0 : index
    %c8 = arith.constant 8 : index
    %c0_59 = arith.constant 0 : index
    %48 = vector.load %arg2[%c0_57, %c0_58, %c8, %c0_59] : memref<1x1x24x24xbf16, #tpu.memory_space<vmem>>, vector<1x1x16x24xbf16>
    %49 = vector.shape_cast %48 : vector<1x1x16x24xbf16> to vector<16x24xbf16>
    %c8_60 = arith.constant 8 : index
    %c0_61 = arith.constant 0 : index
    %c0_62 = arith.constant 0 : index
    %50 = vector.load %arg3[%c8_60, %c0_61, %c0_62] : memref<9x24x480xbf16, #tpu.memory_space<vmem>>, vector<1x24x480xbf16>
    %51 = vector.shape_cast %50 : vector<1x24x480xbf16> to vector<24x480xbf16>
    %cst_63 = arith.constant dense<0.000000e+00> : vector<16x480xf32>
    %52 = tpu.matmul %49, %51, %cst_63 {dimension_numbers = #tpu.dot_dimension_numbers<[1], [0], [0], [1], [0, 0, 1, 1], [], []>} : vector<16x24xbf16>, vector<24x480xbf16>, vector<16x480xf32> -> vector<16x480xf32>
    %53 = arith.addf %47, %52 : vector<16x480xf32>
    %c0_64 = arith.constant 0 : index
    %c0_65 = arith.constant 0 : index
    %54 = vector.load %arg4[%c0_64, %c0_65] : memref<1x480xf32, #tpu.memory_space<vmem>>, vector<1x480xf32>
    %55 = vector.broadcast %54 : vector<1x480xf32> to vector<16x480xf32>
    %56 = arith.addf %53, %55 : vector<16x480xf32>
    %cst_66 = arith.constant 0.000000e+00 : f32
    %57 = vector.broadcast %cst_66 : f32 to vector<16x480xf32>
    %58 = arith.maximumf %56, %57 : vector<16x480xf32>
    %c0_67 = arith.constant 0 : index
    %c0_68 = arith.constant 0 : index
    %59 = vector.load %arg5[%c0_67, %c0_68] : memref<480x16xf32, #tpu.memory_space<vmem>>, vector<480x16xf32>
    %cst_69 = arith.constant dense<0.000000e+00> : vector<16x16xf32>
    %60 = tpu.matmul %58, %59, %cst_69 {dimension_numbers = #tpu.dot_dimension_numbers<[1], [0], [0], [1], [0, 0, 1, 1], [], []>} : vector<16x480xf32>, vector<480x16xf32>, vector<16x16xf32> -> vector<16x16xf32>
    %61 = vector.broadcast %0 : f32 to vector<16x16xf32>
    %62 = arith.addf %60, %61 : vector<16x16xf32>
    %cst_70 = arith.constant 0.000000e+00 : f32
    %63 = vector.broadcast %cst_70 : f32 to vector<16x16xf32>
    %64 = arith.maximumf %62, %63 : vector<16x16xf32>
    %c0_71 = arith.constant 0 : index
    %c0_72 = arith.constant 0 : index
    %c0_73 = arith.constant 0 : index
    %c0_74 = arith.constant 0 : index
    %65 = vector.load %arg7[%c0_71, %c0_72, %c0_73, %c0_74] : memref<1x1x16x16xf32, #tpu.memory_space<vmem>>, vector<1x1x16x16xf32>
    %66 = vector.shape_cast %65 : vector<1x1x16x16xf32> to vector<16x16xf32>
    %67 = vector.shape_cast %64 : vector<16x16xf32> to vector<1x1x16x16xf32>
    tpu.vector_store %arg7[%c0_71, %c0_72, %c0_73, %c0_74], %67 {strides = array<i32>} : memref<1x1x16x16xf32, #tpu.memory_space<vmem>>, vector<1x1x16x16xf32>,
    return
  }
  func.func @transform_0(%arg0: i32, %arg1: i32) -> (i32, i32, i32, i32) {
    %c0_i32 = arith.constant 0 : i32
    %c0_i32_0 = arith.constant 0 : i32
    %c0_i32_1 = arith.constant 0 : i32
    return %arg0, %arg1, %c0_i32, %c0_i32_0 : i32, i32, i32, i32
  }
  func.func @transform_1(%arg0: i32, %arg1: i32) -> (i32, i32, i32) {
    %c0_i32 = arith.constant 0 : i32
    %c0_i32_0 = arith.constant 0 : i32
    %c0_i32_1 = arith.constant 0 : i32
    %c0_i32_2 = arith.constant 0 : i32
    return %c0_i32, %c0_i32_0, %c0_i32_1 : i32, i32, i32
  }
  func.func @transform_2(%arg0: i32, %arg1: i32) -> (i32, i32) {
    %c0_i32 = arith.constant 0 : i32
    %c0_i32_0 = arith.constant 0 : i32
    %c0_i32_1 = arith.constant 0 : i32
    return %c0_i32, %c0_i32_0 : i32, i32
  }
  func.func @transform_3(%arg0: i32, %arg1: i32) -> (i32, i32) {
    %c0_i32 = arith.constant 0 : i32
    %c0_i32_0 = arith.constant 0 : i32
    %c0_i32_1 = arith.constant 0 : i32
    return %c0_i32, %c0_i32_0 : i32, i32
  }
  func.func @transform_4(%arg0: i32, %arg1: i32) -> (i32, i32) {
    %c0_i32 = arith.constant 0 : i32
    %c0_i32_0 = arith.constant 0 : i32
    %c0_i32_1 = arith.constant 0 : i32
    return %c0_i32, %c0_i32_0 : i32, i32
  }
  func.func @transform_5(%arg0: i32, %arg1: i32) -> (i32, i32, i32, i32) {
    %c0_i32 = arith.constant 0 : i32
    %c0_i32_0 = arith.constant 0 : i32
    %c0_i32_1 = arith.constant 0 : i32
    return %arg0, %arg1, %c0_i32, %c0_i32_0 : i32, i32, i32, i32
  }
}

</mosaic_0001>

<llo_original>
// kernel: tile.9
$region0: #{tile.9}
  %s0 = inlined_call_operand.vmem [shape: f32[16,30], index: 0, kind: input, shape index: {}]
  %s1 = inlined_call_operand.vmem [shape: f32[1,480], index: 1, kind: output, shape index: {}]
  $region1: #{tile.9} parent=0
    #allocation0 [shape = 'u8[16384]{0}', space=vmem, size = 0x4000, scoped, tag = 'scoped mem for output reshape']
    %v2 = vld [vmem:[%s0] sm:$0x1]
    %vm3 = vcmask 244736
    %4 = vst.msk [vmem:[#allocation0] sm:$0x1] %vm3, %v2
    %s5 = scalar_lea.vmem %s0, 4
    %v6 = vld [vmem:[%s5] sm:$0x1]
    %s7 = scalar_lea.vmem %s0, 4
    %v8 = vld [vmem:[%s7] sm:$0x1]
    %vm9 = vcmask 64512
    %v10 = vsel %vm9, %v8, %v6
    %11 = vrot.lane.b32.xlu0 %v10, 120
    %v12 = vpop.permute.xlu0 %11
    %vm13 = vcmask 179200
    %s14 = scalar_lea.vmem [#allocation0], 8
    %15 = vst.msk [vmem:[%s14] sm:$0x1] %vm13, %v12
    %vm16 = vcmask 1048512
    %17 = vst.msk [vmem:[#allocation0] sm:$0x1] %vm16, %v12
    %s18 = scalar_lea.vmem %s0, 8
    %v19 = vld [vmem:[%s18] sm:$0x1]
    %s20 = scalar_lea.vmem %s0, 8
    %v21 = vld [vmem:[%s20] sm:$0x1]
    %vm22 = vcmask 130048
    %v23 = vsel %vm22, %v21, %v19
    %24 = vrot.lane.b32.xlu0 %v23, 112
    %v25 = vpop.permute.xlu0 %24
    %vm26 = vcmask 113664
    %s27 = scalar_lea.vmem [#allocation0], 16
    %28 = vst.msk [vmem:[%s27] sm:$0x1] %vm26, %v25
    %vm29 = vcmask 1048448
    %s30 = scalar_lea.vmem [#allocation0], 8
    %31 = vst.msk [vmem:[%s30] sm:$0x1] %vm29, %v25
    %s32 = scalar_lea.vmem %s0, 12
    %v33 = vld [vmem:[%s32] sm:$0x1]
    %s34 = scalar_lea.vmem %s0, 12
    %v35 = vld [vmem:[%s34] sm:$0x1]
    %vm36 = vcmask 195584
    %v37 = vsel %vm36, %v35, %v33
    %38 = vrot.lane.b32.xlu0 %v37, 104
    %v39 = vpop.permute.xlu0 %38
    %vm40 = vcmask 48128
    %s41 = scalar_lea.vmem [#allocation0], 24
    %42 = vst.msk [vmem:[%s41] sm:$0x1] %vm40, %v39
    %vm43 = vcmask 1048384
    %s44 = scalar_lea.vmem [#allocation0], 16
    %45 = vst.msk [vmem:[%s44] sm:$0x1] %vm43, %v39
    %s46 = scalar_lea.vmem %s0, 3
    %v47 = vld [vmem:[%s46] sm:$0x1]
    %48 = vrot.lane.b32.xlu0 %v47, 90
    %v49 = vpop.permute.xlu0 %48
    %vm50 = vcmask 982736
    %51 = vst.msk [vmem:[#allocation0] sm:$0x1] %vm50, %v49
    %s52 = scalar_lea.vmem %s0, 7
    %v53 = vld [vmem:[%s52] sm:$0x1]
    %54 = vrot.lane.b32.xlu0 %v53, 82
    %v55 = vpop.permute.xlu0 %54
    %vm56 = vcmask 917136
    %s57 = scalar_lea.vmem [#allocation0], 8
    %58 = vst.msk [vmem:[%s57] sm:$0x1] %vm56, %v55
    %s59 = scalar_lea.vmem %s0, 11
    %v60 = vld [vmem:[%s59] sm:$0x1]
    %61 = vrot.lane.b32.xlu0 %v60, 74
    %v62 = vpop.permute.xlu0 %61
    %vm63 = vcmask 851536
    %s64 = scalar_lea.vmem [#allocation0], 16
    %65 = vst.msk [vmem:[%s64] sm:$0x1] %vm63, %v62
    %s66 = scalar_lea.vmem %s0, 15
    %v67 = vld [vmem:[%s66] sm:$0x1]
    %68 = vrot.lane.b32.xlu0 %v67, 66
    %v69 = vpop.permute.xlu0 %68
    %vm70 = vcmask 785936
    %s71 = scalar_lea.vmem [#allocation0], 24
    %72 = vst.msk [vmem:[%s71] sm:$0x1] %vm70, %v69
    %s73 = scalar_lea.vmem %s0, 2
    %v74 = vld [vmem:[%s73] sm:$0x1]
    %75 = vrot.lane.b32.xlu0 %v74, 60
    %v76 = vpop.permute.xlu0 %75
    %vm77 = vcmask 736736
    %78 = vst.msk [vmem:[#allocation0] sm:$0x1] %vm77, %v76
    %s79 = scalar_lea.vmem %s0, 6
    %v80 = vld [vmem:[%s79] sm:$0x1]
    %81 = vrot.lane.b32.xlu0 %v80, 52
    %v82 = vpop.permute.xlu0 %81
    %vm83 = vcmask 671136
    %s84 = scalar_lea.vmem [#allocation0], 8
    %85 = vst.msk [vmem:[%s84] sm:$0x1] %vm83, %v82
    %s86 = scalar_lea.vmem %s0, 10
    %v87 = vld [vmem:[%s86] sm:$0x1]
    %88 = vrot.lane.b32.xlu0 %v87, 44
    %v89 = vpop.permute.xlu0 %88
    %vm90 = vcmask 605536
    %s91 = scalar_lea.vmem [#allocation0], 16
    %92 = vst.msk [vmem:[%s91] sm:$0x1] %vm90, %v89
    %s93 = scalar_lea.vmem %s0, 14
    %v94 = vld [vmem:[%s93] sm:$0x1]
    %95 = vrot.lane.b32.xlu0 %v94, 36
    %v96 = vpop.permute.xlu0 %95
    %vm97 = vcmask 539936
    %s98 = scalar_lea.vmem [#allocation0], 24
    %99 = vst.msk [vmem:[%s98] sm:$0x1] %vm97, %v96
    %s100 = scalar_lea.vmem %s0, 1
    %v101 = vld [vmem:[%s100] sm:$0x1]
    %102 = vrot.lane.b32.xlu0 %v101, 30
    %v103 = vpop.permute.xlu0 %102
    %vm104 = vcmask 490736
    %105 = vst.msk [vmem:[#allocation0] sm:$0x1] %vm104, %v103
    %s106 = scalar_lea.vmem %s0, 5
    %v107 = vld [vmem:[%s106] sm:$0x1]
    %108 = vrot.lane.b32.xlu0 %v107, 22
    %v109 = vpop.permute.xlu0 %108
    %vm110 = vcmask 425136
    %s111 = scalar_lea.vmem [#allocation0], 8
    %112 = vst.msk [vmem:[%s111] sm:$0x1] %vm110, %v109
    %s113 = scalar_lea.vmem %s0, 9
    %v114 = vld [vmem:[%s113] sm:$0x1]
    %115 = vrot.lane.b32.xlu0 %v114, 14
    %v116 = vpop.permute.xlu0 %115
    %vm117 = vcmask 359536
    %s118 = scalar_lea.vmem [#allocation0], 16
    %119 = vst.msk [vmem:[%s118] sm:$0x1] %vm117, %v116
    %s120 = scalar_lea.vmem %s0, 13
    %v121 = vld [vmem:[%s120] sm:$0x1]
    %122 = vrot.lane.b32.xlu0 %v121, 6
    %v123 = vpop.permute.xlu0 %122
    %vm124 = vcmask 293936
    %s125 = scalar_lea.vmem [#allocation0], 24
    %126 = vst.msk [vmem:[%s125] sm:$0x1] %vm124, %v123
    %s128 = ssub.s32 2, 1
    %v129 = vld [vmem:[#allocation0] sm:%s128]
    %s131 = ssub.s32 2, 1
    %132 = vst [vmem:[%s1] sm:%s131] %v129
    %s133 = scalar_lea.vmem [#allocation0], 8
    %v134 = vld [vmem:[%s133] sm:%s128]
    %s136 = ssub.s32 2, 1
    %s137 = scalar_lea.vmem %s1, 1
    %138 = vst [vmem:[%s137] sm:%s136] %v134
    %s139 = scalar_lea.vmem [#allocation0], 16
    %v140 = vld [vmem:[%s139] sm:%s128]
    %s142 = ssub.s32 2, 1
    %s143 = scalar_lea.vmem %s1, 2
    %144 = vst [vmem:[%s143] sm:%s142] %v140
    %s145 = scalar_lea.vmem [#allocation0], 24
    %v146 = vld [vmem:[%s145] sm:%s128]
    %s148 = ssub.s32 2, 1
    %s149 = scalar_lea.vmem %s1, 3
    %150 = vst [vmem:[%s149] sm:%s148] %v146

// kernel: mcnn_forward.1
$region0: #{mcnn_forward.1}
  #allocation0 [shape = 'u32[]', space=smem, size = 0x4, offset = 0x4, fixed_abs, tag = 'smem constant byte address 0x4 - core index']
  #allocation1 [shape = 'u32[72,128]{1,0:T(1,128)}', space=vmem, size = 0x9000, scoped, tag = 'internal scratch']
  #allocation2 [shape = 'f32[1,1]{1,0:T(1,128)S(6)}', space=smem, size = 0x200, scoped, tag = 'scoped memory for mcnn_forward.1']
  %s0 = inlined_call_operand.vmem [shape: bf16[2,1,24,24], index: 0, kind: input, shape index: {}]
  %s1 = inlined_call_operand.vmem [shape: bf16[9,24,480], index: 1, kind: input, shape index: {}]
  %s2 = inlined_call_operand.vmem [shape: f32[1,480], index: 2, kind: input, shape index: {}]
  %s3 = inlined_call_operand.vmem [shape: f32[480,16], index: 3, kind: input, shape index: {}]
  %s4 = inlined_call_operand.<no memory space> [shape: f32[1,1], index: 4, kind: input, shape index: {}]
  %s5 = inlined_call_operand.hbm [shape: f32[2,1,16,16], index: 5, kind: output, shape index: {}]
  %s6 = sld [smem:[#allocation0]]
  $region53: #{mcnn_forward.1} parent=0
    _
  %s8 = ssub.s32 1, %s6
  %s9 = scalar_select 0, %s8, %s6
  %10 = sst [smem:[#allocation2]] %s4
  $region1: #{mcnn_forward.1} parent=0
    #allocation3 [shape = 'u8[16384]{0}', space=vmem, size = 0x4000, scoped, tag = 'output window, operand 0']
    #allocation4 [shape = 's32[2]{0}', space=sflag, size = 0x8, scoped, tag = 'scoped memory for mcnn_forward.1']
    %11 = vsyncpa [#allocation4], 0
    %s12 = scalar_lea.sflag [#allocation4], 1
    %13 = vsyncpa %s12, 0
    loop: start=0, step=1, limit=4
    $region2: #{mcnn_forward.1} parent=1 // loop_pre_header
      _
    $region3: #{mcnn_forward.1} parent=1 // loop_header
      %s15 = sphi 0, %s19
      %p16 = scmp.ge.s32.totalorder %s15, 4
      %s22 = sphi 0, %s34
      %s23 = sphi 0, %s30
      %s24 = sphi 0, %s22
      %s25 = sphi 0, %s23
      %s26 = sphi 0, %s24
      %s27 = sphi 0, %s25
      %s39 = sphi 0, %s41
      %s42 = sphi 0, %s39
      %s43 = sphi 0, %s42
      %s59 = sphi 0, %s43
      %s63 = sphi 0, %s63
      %s65 = sphi 0, %s63
      %s66 = sphi 0, %s65
      %s80 = sphi 0, %s66
      %s84 = sphi 0, %s84
      %s86 = sphi 0, %s84
      %s87 = sphi 0, %s86
      %s101 = sphi 0, %s87
      %s105 = sphi 0, %s105
      %s107 = sphi 0, %s105
      %s108 = sphi 0, %s107
      %s122 = sphi 0, %s108
      %s126 = sphi 0, %s126
      %s128 = sphi 0, %s126
      %s129 = sphi 0, %s128
      %s143 = sphi 0, %s129
      %s151 = sphi 0, %s153
      %s154 = sphi 0, %s151
      %s155 = sphi 0, %s154
      %s171 = sphi 0, %s155
    $region4: #{mcnn_forward.1} parent=1 // loop_header_branch
      %18 = sbr.rel (%p16) target = $region8
    $region5: #{mcnn_forward.1} parent=1 // loop_body
      %s20 = ssub.s32 %s15, 1
      %s21 = ssub.s32 %s15, 2
      %s28 = sadd.s32 1, %s23
      %p29 = scmp.ge.s32.totalorder %s28, 1
      %s30 = scalar_select %p29, 0, %s28
      %s31 = sadd.s32 1, %s22
      %s32 = scalar_select %p29, %s31, %s22
      %p33 = scmp.ge.s32.totalorder %s32, 2
      %s34 = scalar_select %p33, 0, %s32
      %s35 = ssub.s32 %s22, %s34
      %s36 = ssub.s32 %s23, %s30
      %s37 = sor.u32 %s35, %s36
      %p38 = scmp.eq.s32.totalorder %s37, 0
      %s40 = sadd.s32 %s39, 1
      %s41 = scalar_select %p38, %s39, %s40
      %p44 = pneg %p38
      %p45 = scmp.eq.s32.totalorder %s15, 1
      %p46 = por %p44, %p45
      %p47 = scmp.ne.s32.totalorder %s39, %s42
      %p48 = scmp.eq.s32.totalorder %s15, 0
      %p49 = por %p47, %p48
      %p50 = scmp.ne.s32.totalorder %s39, %s42
      %p51 = scmp.eq.s32.totalorder %s20, 1
      %p52 = por %p50, %p51
      %p53 = scmp.ne.s32.totalorder %s42, %s43
      %p54 = scmp.eq.s32.totalorder %s20, 0
      %p55 = por %p53, %p54
      %p56 = scmp.ne.s32.totalorder %s42, %s43
      %p57 = scmp.eq.s32.totalorder %s21, 1
      %p58 = por %p56, %p57
      %p60 = scmp.ne.s32.totalorder %s43, %s59
      %p61 = scmp.eq.s32.totalorder %s21, 0
      %p62 = por %p60, %p61
      %s64 = sadd.s32 %s63, 1
      %p67 = scmp.eq.s32.totalorder %s15, 1
      %p68 = scmp.ne.s32.totalorder %s63, %s65
      %p69 = scmp.eq.s32.totalorder %s15, 0
      %p70 = por %p68, %p69
      %p71 = scmp.ne.s32.totalorder %s63, %s65
      %p72 = scmp.eq.s32.totalorder %s20, 1
      %p73 = por %p71, %p72
      %p74 = scmp.ne.s32.totalorder %s65, %s66
      %p75 = scmp.eq.s32.totalorder %s20, 0
      %p76 = por %p74, %p75
      %p77 = scmp.ne.s32.totalorder %s65, %s66
      %p78 = scmp.eq.s32.totalorder %s21, 1
      %p79 = por %p77, %p78
      %p81 = scmp.ne.s32.totalorder %s66, %s80
      %p82 = scmp.eq.s32.totalorder %s21, 0
      %p83 = por %p81, %p82
      %s85 = sadd.s32 %s84, 1
      %p88 = scmp.eq.s32.totalorder %s15, 1
      %p89 = scmp.ne.s32.totalorder %s84, %s86
      %p90 = scmp.eq.s32.totalorder %s15, 0
      %p91 = por %p89, %p90
      %p92 = scmp.ne.s32.totalorder %s84, %s86
      %p93 = scmp.eq.s32.totalorder %s20, 1
      %p94 = por %p92, %p93
      %p95 = scmp.ne.s32.totalorder %s86, %s87
      %p96 = scmp.eq.s32.totalorder %s20, 0
      %p97 = por %p95, %p96
      %p98 = scmp.ne.s32.totalorder %s86, %s87
      %p99 = scmp.eq.s32.totalorder %s21, 1
      %p100 = por %p98, %p99
      %p102 = scmp.ne.s32.totalorder %s87, %s101
      %p103 = scmp.eq.s32.totalorder %s21, 0
      %p104 = por %p102, %p103
      %s106 = sadd.s32 %s105, 1
      %p109 = scmp.eq.s32.totalorder %s15, 1
      %p110 = scmp.ne.s32.totalorder %s105, %s107
      %p111 = scmp.eq.s32.totalorder %s15, 0
      %p112 = por %p110, %p111
      %p113 = scmp.ne.s32.totalorder %s105, %s107
      %p114 = scmp.eq.s32.totalorder %s20, 1
      %p115 = por %p113, %p114
      %p116 = scmp.ne.s32.totalorder %s107, %s108
      %p117 = scmp.eq.s32.totalorder %s20, 0
      %p118 = por %p116, %p117
      %p119 = scmp.ne.s32.totalorder %s107, %s108
      %p120 = scmp.eq.s32.totalorder %s21, 1
      %p121 = por %p119, %p120
      %p123 = scmp.ne.s32.totalorder %s108, %s122
      %p124 = scmp.eq.s32.totalorder %s21, 0
      %p125 = por %p123, %p124
      %s127 = sadd.s32 %s126, 1
      %p130 = scmp.eq.s32.totalorder %s15, 1
      %p131 = scmp.ne.s32.totalorder %s126, %s128
      %p132 = scmp.eq.s32.totalorder %s15, 0
      %p133 = por %p131, %p132
      %p134 = scmp.ne.s32.totalorder %s126, %s128
      %p135 = scmp.eq.s32.totalorder %s20, 1
      %p136 = por %p134, %p135
      %p137 = scmp.ne.s32.totalorder %s128, %s129
      %p138 = scmp.eq.s32.totalorder %s20, 0
      %p139 = por %p137, %p138
      %p140 = scmp.ne.s32.totalorder %s128, %s129
      %p141 = scmp.eq.s32.totalorder %s21, 1
      %p142 = por %p140, %p141
      %p144 = scmp.ne.s32.totalorder %s129, %s143
      %p145 = scmp.eq.s32.totalorder %s21, 0
      %p146 = por %p144, %p145
      %s147 = ssub.s32 %s22, %s34
      %s148 = ssub.s32 %s23, %s30
      %s149 = sor.u32 %s147, %s148
      %p150 = scmp.eq.s32.totalorder %s149, 0
      %s152 = sadd.s32 %s151, 1
      %s153 = scalar_select %p150, %s151, %s152
      %p156 = pneg %p150
      %p157 = scmp.eq.s32.totalorder %s15, 1
      %p158 = por %p156, %p157
      %p159 = scmp.ne.s32.totalorder %s151, %s154
      %p160 = scmp.eq.s32.totalorder %s15, 0
      %p161 = por %p159, %p160
      %p162 = scmp.ne.s32.totalorder %s151, %s154
      %p163 = scmp.eq.s32.totalorder %s20, 1
      %p164 = por %p162, %p163
      %p165 = scmp.ne.s32.totalorder %s154, %s155
      %p166 = scmp.eq.s32.totalorder %s20, 0
      %p167 = por %p165, %p166
      %p168 = scmp.ne.s32.totalorder %s154, %s155
      %p169 = scmp.eq.s32.totalorder %s21, 1
      %p170 = por %p168, %p169
      %p172 = scmp.ne.s32.totalorder %s155, %s171
      %p173 = scmp.eq.s32.totalorder %s21, 0
      %p174 = por %p172, %p173
      %p175 = scmp.le.s32.totalorder 1, %s15
      %p176 = scmp.lt.s32.totalorder %s15, 3
      %p177 = pnand %p175, %p176
      %p178 = pneg %p177
      // Predicated region
      $region9: #{mcnn_forward.1} parent=5 // pred_check
        _
      $region10: #{mcnn_forward.1} parent=5 // pred_check_branch
        %180 = sbr.rel (%p177) target = $region12
      $region11: #{mcnn_forward.1} parent=5 // pred_region
        %s181 = ssub.s32 %s15, 1
        // Predicated region
        $region13: #{mcnn_forward.1} parent=11 // pred_check
          %p182 = pneg %p76
        $region14: #{mcnn_forward.1} parent=11 // pred_check_branch
          %184 = sbr.rel (%p182) target = $region16
        $region15: #{mcnn_forward.1} parent=11 // pred_region
          _
        $region16: #{mcnn_forward.1} parent=11 // pred_fallthru
          _
        // Predicated region
        $region17: #{mcnn_forward.1} parent=11 // pred_check
          %p185 = pneg %p97
        $region18: #{mcnn_forward.1} parent=11 // pred_check_branch
          %187 = sbr.rel (%p185) target = $region20
        $region19: #{mcnn_forward.1} parent=11 // pred_region
          _
        $region20: #{mcnn_forward.1} parent=11 // pred_fallthru
          _
        // Predicated region
        $region21: #{mcnn_forward.1} parent=11 // pred_check
          %p188 = pneg %p118
        $region22: #{mcnn_forward.1} parent=11 // pred_check_branch
          %190 = sbr.rel (%p188) target = $region24
        $region23: #{mcnn_forward.1} parent=11 // pred_region
          _
        $region24: #{mcnn_forward.1} parent=11 // pred_fallthru
          _
        // Predicated region
        $region25: #{mcnn_forward.1} parent=11 // pred_check
          %p191 = pneg %p139
        $region26: #{mcnn_forward.1} parent=11 // pred_check_branch
          %193 = sbr.rel (%p191) target = $region28
        $region27: #{mcnn_forward.1} parent=11 // pred_region
          _
        $region28: #{mcnn_forward.1} parent=11 // pred_fallthru
          _
      $region12: #{mcnn_forward.1} parent=5 // pred_fallthru
        _
      %p194 = scmp.lt.s32.totalorder %s15, 2
      // Predicated region
      $region29: #{mcnn_forward.1} parent=5 // pred_check
        %p195 = pneg %p194
      $region30: #{mcnn_forward.1} parent=5 // pred_check_branch
        %197 = sbr.rel (%p195) target = $region32
      $region31: #{mcnn_forward.1} parent=5 // pred_region
        // Predicated region
        $region33: #{mcnn_forward.1} parent=31 // pred_check
          %p198 = pneg %p49
        $region34: #{mcnn_forward.1} parent=31 // pred_check_branch
          %200 = sbr.rel (%p198) target = $region36
        $region35: #{mcnn_forward.1} parent=31 // pred_region
          %p201 = scmp.lt.s32.totalorder %s22, 1
          %s202 = scalar_select %p201, %s22, 1
          %p203 = scmp.lt.s32.totalorder %s23, 0
          %s204 = scalar_select %p203, %s23, 0
          %s205 = smul.addr %s204, 3
          %s206 = smul.addr %s202, 3
          %s207 = sadd.s32 %s205, %s206
          %s208 = smul.addr %s207, 4
          %s209 = scalar_lea.vmem %s0, %s208
        $region36: #{mcnn_forward.1} parent=31 // pred_fallthru
          _
      $region32: #{mcnn_forward.1} parent=5 // pred_fallthru
        _
      %p210 = scmp.le.s32.totalorder 1, %s15
      %p211 = scmp.lt.s32.totalorder %s15, 3
      %p212 = pnand %p210, %p211
      %p213 = pneg %p212
      // Predicated region
      $region37: #{mcnn_forward.1} parent=5 // pred_check
        _
      $region38: #{mcnn_forward.1} parent=5 // pred_check_branch
        %215 = sbr.rel (%p212) target = $region40
      $region39: #{mcnn_forward.1} parent=5 // pred_region
        %s216 = ssub.s32 %s15, 1
        %p217 = scmp.lt.s32.totalorder %s24, 1
        %s218 = scalar_select %p217, %s24, 1
        %p219 = scmp.lt.s32.totalorder %s25, 0
        %s220 = scalar_select %p219, %s25, 0
        %s221 = smul.addr %s220, 3
        %s222 = smul.addr %s218, 3
        %s223 = sadd.s32 %s221, %s222
        %s224 = smul.addr %s223, 4
        %s225 = scalar_lea.vmem %s0, %s224
        %p226 = pneg %p55
        %p227 = pneg %p52
        %p228 = pneg %p76
        %p229 = pneg %p73
        %p230 = pneg %p97
        %p231 = pneg %p94
        %p232 = pneg %p118
        %p233 = pneg %p115
        %p234 = pneg %p139
        %p235 = pneg %p136
        %p236 = pneg %p167
        %p237 = pneg %p164
        %s238 = sand.u32 %s154, 1
        %s239 = scalar_lea.sflag [#allocation4], %s238
        %s240 = sand.u32 %s154, 1
        %s241 = smul.addr %s240, 16
        %s242 = scalar_lea.vmem [#allocation3], %s241
        %p243 = scmp.lt.s32.totalorder %s24, 1
        %s244 = scalar_select %p243, %s24, 1
        %p245 = scmp.lt.s32.totalorder %s25, 0
        %s246 = scalar_select %p245, %s25, 0
        %s247 = smul.addr %s246, 3
        %s248 = smul.addr %s244, 3
        %s249 = sadd.s32 %s247, %s248
        %s250 = smul.addr %s249, 4
        %s251 = scalar_lea.vmem %s0, %s250
        %s253 = sld [smem:[#allocation2]]
        %v254 = vld [vmem:[%s251] sm:$0xf]
        %v255 = vld [vmem:[%s251 + $0x4] sm:$0xf]
        %v256 = vld [vmem:[%s1] sm:$0xff]
        %v257 = vld [vmem:[%s1 + $0x8] sm:$0xff]
        %v258 = vld [vmem:[%s1 + $0x10] sm:$0xff]
        %v259 = vld [vmem:[%s1 + $0x18] sm:$0xff]
        %v260 = vld [vmem:[%s1 + $0x20] sm:$0xff]
        %v261 = vld [vmem:[%s1 + $0x28] sm:$0xff]
        %v262 = vld [vmem:[%s251 + $0x8] sm:$0x1]
        %s263 = scalar_lea.vmem %s1, 48
        %v264 = vld [vmem:[%s263] sm:$0xff]
        %v265 = vld [vmem:[%s263 + $0x8] sm:$0xff]
        %v266 = vld [vmem:[%s263 + $0x10] sm:$0xff]
        %v267 = vld [vmem:[%s263 + $0x18] sm:$0xff]
        %v268 = vld [vmem:[%s263 + $0x20] sm:$0xff]
        %v269 = vld [vmem:[%s263 + $0x28] sm:$0xff]
        %v273 = vunpack.c.l.b16 %v254
        %v274 = vunpack.c.l.b16 %v255
        %v275 = vunpack.c.l.b16 %v262
        %v276 = vpack.c.b16 %v274, %v273
        %v277 = vpack.c.b16 %v275, %v275
        %vm278 = vsmask.f32 7424
        %v280 = vshrl.u32 %v276, 16
        %v282 = vshll.u32 %v276, 16
        %v284 = vrot.slane %v282, 1
        %v285 = vor.u32 %v280, %v284
        %v287 = vshll.u32 %v277, 16
        %v289 = vrot.slane %v287, 1
        %v290 = vsel %vm278, %v285, %v289
        %v297 = vunpack.c.l.b16 %v264
        %v298 = vunpack.c.h.b16 %v264
        %v299 = vunpack.c.l.b16 %v265
        %v300 = vunpack.c.h.b16 %v265
        %v301 = vunpack.c.l.b16 %v266
        %v302 = vunpack.c.h.b16 %v266
        %v303 = vunpack.c.l.b16 %v267
        %v304 = vunpack.c.h.b16 %v267
        %v305 = vunpack.c.l.b16 %v268
        %v306 = vunpack.c.h.b16 %v268
        %v307 = vunpack.c.l.b16 %v269
        %v308 = vunpack.c.h.b16 %v269
        %v309 = vpack.c.b16 %v301, %v297
        %v310 = vpack.c.b16 %v302, %v298
        %v311 = vpack.c.b16 %v303, %v299
        %v312 = vpack.c.b16 %v304, %v300
        %v313 = vpack.c.b16 %v305, %v305
        %v314 = vpack.c.b16 %v306, %v306
        %v315 = vpack.c.b16 %v307, %v307
        %v316 = vpack.c.b16 %v308, %v308
        %vm321 = vcmask 195584
        %v323 = vsel %vm321, %v290, 0
        %vm325 = vcmask 1043456
        %v327 = vsel %vm325, %v313, 0
        %v330 = vsel %vm325, %v314, 0
        %v333 = vsel %vm325, %v315, 0
        %v336 = vsel %vm325, %v316, 0
        %338 = vmatpush.bf16.msra.mxu0 0
        %339 = vmatpush.bf16.msra.mxu0 0
        %340 = vmatpush.bf16.msra.mxu0 0
        %341 = vmatpush.bf16.msra.mxu0 0
        %342 = vmatpush.bf16.msra.mxu0 0
        %343 = vmatpush.bf16.msra.mxu0 0
        %344 = vmatpush.bf16.msra.mxu0 %v327
        %345 = vmatpush.bf16.msra.mxu0 %v309
        %346 = vmatmul.bf16.gmra.mxu0 %v323
        %v347 = vpop.f32.mrf.mxu0
        %v348 = vadd.f32 0.0, %v347
        %v349 = vpop.f32.mrf.mxu0
        %v350 = vadd.f32 0.0, %v349
        %351 = vdwg.mxu0
        %352 = vmatpush.bf16.msra.mxu0 0
        %353 = vmatpush.bf16.msra.mxu0 0
        %354 = vmatpush.bf16.msra.mxu0 0
        %355 = vmatpush.bf16.msra.mxu0 0
        %356 = vmatpush.bf16.msra.mxu0 0
        %357 = vmatpush.bf16.msra.mxu0 0
        %358 = vmatpush.bf16.msra.mxu0 %v330
        %359 = vmatpush.bf16.msra.mxu0 %v310
        %360 = vmatmul.bf16.gmra.mxu0 %v323
        %v361 = vpop.f32.mrf.mxu0
        %v362 = vadd.f32 0.0, %v361
        %v363 = vpop.f32.mrf.mxu0
        %v364 = vadd.f32 0.0, %v363
        %365 = vdwg.mxu0
        %366 = vmatpush.bf16.msra.mxu0 0
        %367 = vmatpush.bf16.msra.mxu0 0
        %368 = vmatpush.bf16.msra.mxu0 0
        %369 = vmatpush.bf16.msra.mxu0 0
        %370 = vmatpush.bf16.msra.mxu0 0
        %371 = vmatpush.bf16.msra.mxu0 0
        %372 = vmatpush.bf16.msra.mxu0 %v333
        %373 = vmatpush.bf16.msra.mxu0 %v311
        %374 = vmatmul.bf16.gmra.mxu0 %v323
        %v375 = vpop.f32.mrf.mxu0
        %v376 = vadd.f32 0.0, %v375
        %v377 = vpop.f32.mrf.mxu0
        %v378 = vadd.f32 0.0, %v377
        %379 = vdwg.mxu0
        %380 = vmatpush.bf16.msra.mxu0 0
        %381 = vmatpush.bf16.msra.mxu0 0
        %382 = vmatpush.bf16.msra.mxu0 0
        %383 = vmatpush.bf16.msra.mxu0 0
        %384 = vmatpush.bf16.msra.mxu0 0
        %385 = vmatpush.bf16.msra.mxu0 0
        %386 = vmatpush.bf16.msra.mxu0 %v336
        %387 = vmatpush.bf16.msra.mxu0 %v312
        %388 = vmatmul.bf16.gmra.mxu0 %v323
        %v389 = vpop.f32.mrf.mxu0
        %v390 = vadd.f32 0.0, %v389
        %v391 = vpop.f32.mrf.mxu0
        %v392 = vadd.f32 0.0, %v391
        %393 = vdwg.mxu0
        %v400 = vunpack.c.l.b16 %v256
        %v401 = vunpack.c.h.b16 %v256
        %v402 = vunpack.c.l.b16 %v257
        %v403 = vunpack.c.h.b16 %v257
        %v404 = vunpack.c.l.b16 %v258
        %v405 = vunpack.c.h.b16 %v258
        %v406 = vunpack.c.l.b16 %v259
        %v407 = vunpack.c.h.b16 %v259
        %v408 = vunpack.c.l.b16 %v260
        %v409 = vunpack.c.h.b16 %v260
        %v410 = vunpack.c.l.b16 %v261
        %v411 = vunpack.c.h.b16 %v261
        %v412 = vpack.c.b16 %v404, %v400
        %v413 = vpack.c.b16 %v405, %v401
        %v414 = vpack.c.b16 %v406, %v402
        %v415 = vpack.c.b16 %v407, %v403
        %v416 = vpack.c.b16 %v408, %v408
        %v417 = vpack.c.b16 %v409, %v409
        %v418 = vpack.c.b16 %v410, %v410
        %v419 = vpack.c.b16 %v411, %v411
        %v424 = vsel %vm321, %v276, 0
        %v427 = vsel %vm325, %v416, 0
        %v430 = vsel %vm325, %v417, 0
        %v433 = vsel %vm325, %v418, 0
        %v436 = vsel %vm325, %v419, 0
        %438 = vmatpush.bf16.msra.mxu0 0
        %439 = vmatpush.bf16.msra.mxu0 0
        %440 = vmatpush.bf16.msra.mxu0 0
        %441 = vmatpush.bf16.msra.mxu0 0
        %442 = vmatpush.bf16.msra.mxu0 0
        %443 = vmatpush.bf16.msra.mxu0 0
        %444 = vmatpush.bf16.msra.mxu0 %v427
        %445 = vmatpush.bf16.msra.mxu0 %v412
        %446 = vmatmul.bf16.gmra.mxu0 %v424
        %v447 = vpop.f32.mrf.mxu0
        %v448 = vadd.f32 %v348, %v447
        %v449 = vpop.f32.mrf.mxu0
        %v450 = vadd.f32 %v350, %v449
        %451 = vdwg.mxu0
        %452 = vmatpush.bf16.msra.mxu0 0
        %453 = vmatpush.bf16.msra.mxu0 0
        %454 = vmatpush.bf16.msra.mxu0 0
        %455 = vmatpush.bf16.msra.mxu0 0
        %456 = vmatpush.bf16.msra.mxu0 0
        %457 = vmatpush.bf16.msra.mxu0 0
        %458 = vmatpush.bf16.msra.mxu0 %v430
        %459 = vmatpush.bf16.msra.mxu0 %v413
        %460 = vmatmul.bf16.gmra.mxu0 %v424
        %v461 = vpop.f32.mrf.mxu0
        %v462 = vadd.f32 %v362, %v461
        %v463 = vpop.f32.mrf.mxu0
        %v464 = vadd.f32 %v364, %v463
        %465 = vdwg.mxu0
        %466 = vmatpush.bf16.msra.mxu0 0
        %467 = vmatpush.bf16.msra.mxu0 0
        %468 = vmatpush.bf16.msra.mxu0 0
        %469 = vmatpush.bf16.msra.mxu0 0
        %470 = vmatpush.bf16.msra.mxu0 0
        %471 = vmatpush.bf16.msra.mxu0 0
        %472 = vmatpush.bf16.msra.mxu0 %v433
        %473 = vmatpush.bf16.msra.mxu0 %v414
        %474 = vmatmul.bf16.gmra.mxu0 %v424
        %v475 = vpop.f32.mrf.mxu0
        %v476 = vadd.f32 %v376, %v475
        %v477 = vpop.f32.mrf.mxu0
        %v478 = vadd.f32 %v378, %v477
        %479 = vdwg.mxu0
        %480 = vmatpush.bf16.msra.mxu0 0
        %481 = vmatpush.bf16.msra.mxu0 0
        %482 = vmatpush.bf16.msra.mxu0 0
        %483 = vmatpush.bf16.msra.mxu0 0
        %484 = vmatpush.bf16.msra.mxu0 0
        %485 = vmatpush.bf16.msra.mxu0 0
        %486 = vmatpush.bf16.msra.mxu0 %v436
        %487 = vmatpush.bf16.msra.mxu0 %v415
        %488 = vmatmul.bf16.gmra.mxu0 %v424
        %v489 = vpop.f32.mrf.mxu0
        %v490 = vadd.f32 %v390, %v489
        %v491 = vpop.f32.mrf.mxu0
        %v492 = vadd.f32 %v392, %v491
        %493 = vdwg.mxu0
        %v494 = vld [vmem:[%s251] sm:$0xe]
        %s495 = scalar_lea.vmem %s1, 96
        %v496 = vld [vmem:[%s495] sm:$0xff]
        %v497 = vld [vmem:[%s495 + $0x8] sm:$0xff]
        %v498 = vld [vmem:[%s495 + $0x10] sm:$0xff]
        %v499 = vld [vmem:[%s495 + $0x18] sm:$0xff]
        %v500 = vld [vmem:[%s495 + $0x20] sm:$0xff]
        %v501 = vld [vmem:[%s495 + $0x28] sm:$0xff]
        %v503 = vunpack.c.l.b16 %v494
        %v504 = vpack.c.b16 %v274, %v503
        %vm505 = vcmask 1046528
        %v506 = vrot.slane %v504, 1
        %v507 = vrot.slane %v277, 1
        %v508 = vsel %vm505, %v506, %v507
        %v515 = vunpack.c.l.b16 %v496
        %v516 = vunpack.c.h.b16 %v496
        %v517 = vunpack.c.l.b16 %v497
        %v518 = vunpack.c.h.b16 %v497
        %v519 = vunpack.c.l.b16 %v498
        %v520 = vunpack.c.h.b16 %v498
        %v521 = vunpack.c.l.b16 %v499
        %v522 = vunpack.c.h.b16 %v499
        %v523 = vunpack.c.l.b16 %v500
        %v524 = vunpack.c.h.b16 %v500
        %v525 = vunpack.c.l.b16 %v501
        %v526 = vunpack.c.h.b16 %v501
        %v527 = vpack.c.b16 %v519, %v515
        %v528 = vpack.c.b16 %v520, %v516
        %v529 = vpack.c.b16 %v521, %v517
        %v530 = vpack.c.b16 %v522, %v518
        %v531 = vpack.c.b16 %v523, %v523
        %v532 = vpack.c.b16 %v524, %v524
        %v533 = vpack.c.b16 %v525, %v525
        %v534 = vpack.c.b16 %v526, %v526
        %v540 = vsel %vm321, %v508, 0
        %v543 = vsel %vm325, %v531, 0
        %v546 = vsel %vm325, %v532, 0
        %v549 = vsel %vm325, %v533, 0
        %v552 = vsel %vm325, %v534, 0
        %554 = vmatpush.bf16.msra.mxu0 0
        %555 = vmatpush.bf16.msra.mxu0 0
        %556 = vmatpush.bf16.msra.mxu0 0
        %557 = vmatpush.bf16.msra.mxu0 0
        %558 = vmatpush.bf16.msra.mxu0 0
        %559 = vmatpush.bf16.msra.mxu0 0
        %560 = vmatpush.bf16.msra.mxu0 %v543
        %561 = vmatpush.bf16.msra.mxu0 %v527
        %562 = vmatmul.bf16.gmra.mxu0 %v540
        %v563 = vpop.f32.mrf.mxu0
        %v564 = vadd.f32 0.0, %v563
        %v565 = vpop.f32.mrf.mxu0
        %v566 = vadd.f32 0.0, %v565
        %567 = vdwg.mxu0
        %568 = vmatpush.bf16.msra.mxu0 0
        %569 = vmatpush.bf16.msra.mxu0 0
        %570 = vmatpush.bf16.msra.mxu0 0
        %571 = vmatpush.bf16.msra.mxu0 0
        %572 = vmatpush.bf16.msra.mxu0 0
        %573 = vmatpush.bf16.msra.mxu0 0
        %574 = vmatpush.bf16.msra.mxu0 %v546
        %575 = vmatpush.bf16.msra.mxu0 %v528
        %576 = vmatmul.bf16.gmra.mxu0 %v540
        %v577 = vpop.f32.mrf.mxu0
        %v578 = vadd.f32 0.0, %v577
        %v579 = vpop.f32.mrf.mxu0
        %v580 = vadd.f32 0.0, %v579
        %581 = vdwg.mxu0
        %582 = vmatpush.bf16.msra.mxu0 0
        %583 = vmatpush.bf16.msra.mxu0 0
        %584 = vmatpush.bf16.msra.mxu0 0
        %585 = vmatpush.bf16.msra.mxu0 0
        %586 = vmatpush.bf16.msra.mxu0 0
        %587 = vmatpush.bf16.msra.mxu0 0
        %588 = vmatpush.bf16.msra.mxu0 %v549
        %589 = vmatpush.bf16.msra.mxu0 %v529
        %590 = vmatmul.bf16.gmra.mxu0 %v540
        %v591 = vpop.f32.mrf.mxu0
        %v592 = vadd.f32 0.0, %v591
        %v593 = vpop.f32.mrf.mxu0
        %v594 = vadd.f32 0.0, %v593
        %595 = vdwg.mxu0
        %596 = vmatpush.bf16.msra.mxu0 0
        %597 = vmatpush.bf16.msra.mxu0 0
        %598 = vmatpush.bf16.msra.mxu0 0
        %599 = vmatpush.bf16.msra.mxu0 0
        %600 = vmatpush.bf16.msra.mxu0 0
        %601 = vmatpush.bf16.msra.mxu0 0
        %602 = vmatpush.bf16.msra.mxu0 %v552
        %603 = vmatpush.bf16.msra.mxu0 %v530
        %604 = vmatmul.bf16.gmra.mxu0 %v540
        %v605 = vpop.f32.mrf.mxu0
        %v606 = vadd.f32 0.0, %v605
        %v607 = vpop.f32.mrf.mxu0
        %v608 = vadd.f32 0.0, %v607
        %609 = vdwg.mxu0
        %v610 = vadd.f32 %v448, %v564
        %v611 = vadd.f32 %v462, %v578
        %v612 = vadd.f32 %v476, %v592
        %v613 = vadd.f32 %v490, %v606
        %v614 = vadd.f32 %v450, %v566
        %v615 = vadd.f32 %v464, %v580
        %v616 = vadd.f32 %v478, %v594
        %v617 = vadd.f32 %v492, %v608
        %v618 = vld [vmem:[%s251 + $0x8] sm:$0x3]
        %s619 = scalar_lea.vmem %s1, 144
        %v620 = vld [vmem:[%s619] sm:$0xff]
        %v621 = vld [vmem:[%s619 + $0x8] sm:$0xff]
        %v622 = vld [vmem:[%s619 + $0x10] sm:$0xff]
        %v623 = vld [vmem:[%s619 + $0x18] sm:$0xff]
        %v624 = vld [vmem:[%s619 + $0x20] sm:$0xff]
        %v625 = vld [vmem:[%s619 + $0x28] sm:$0xff]
        %v627 = vunpack.c.l.b16 %v618
        %v628 = vpack.c.b16 %v627, %v627
        %vm629 = vsmask.f32 6400
        %v631 = vshrl.u32 %v504, 16
        %v633 = vrot.slane %v631, 1
        %v634 = vshll.u32 %v504, 16
        %v636 = vrot.slane %v634, 2
        %v637 = vor.u32 %v633, %v636
        %v639 = vshrl.u32 %v628, 16
        %v641 = vrot.slane %v639, 1
        %v642 = vshll.u32 %v628, 16
        %v644 = vrot.slane %v642, 2
        %v645 = vor.u32 %v641, %v644
        %v646 = vsel %vm629, %v637, %v645
        %v653 = vunpack.c.l.b16 %v620
        %v654 = vunpack.c.h.b16 %v620
        %v655 = vunpack.c.l.b16 %v621
        %v656 = vunpack.c.h.b16 %v621
        %v657 = vunpack.c.l.b16 %v622
        %v658 = vunpack.c.h.b16 %v622
        %v659 = vunpack.c.l.b16 %v623
        %v660 = vunpack.c.h.b16 %v623
        %v661 = vunpack.c.l.b16 %v624
        %v662 = vunpack.c.h.b16 %v624
        %v663 = vunpack.c.l.b16 %v625
        %v664 = vunpack.c.h.b16 %v625
        %v665 = vpack.c.b16 %v657, %v653
        %v666 = vpack.c.b16 %v658, %v654
        %v667 = vpack.c.b16 %v659, %v655
        %v668 = vpack.c.b16 %v660, %v656
        %v669 = vpack.c.b16 %v661, %v661
        %v670 = vpack.c.b16 %v662, %v662
        %v671 = vpack.c.b16 %v663, %v663
        %v672 = vpack.c.b16 %v664, %v664
        %v678 = vsel %vm321, %v646, 0
        %v681 = vsel %vm325, %v669, 0
        %v684 = vsel %vm325, %v670, 0
        %v687 = vsel %vm325, %v671, 0
        %v690 = vsel %vm325, %v672, 0
        %692 = vmatpush.bf16.msra.mxu0 0
        %693 = vmatpush.bf16.msra.mxu0 0
        %694 = vmatpush.bf16.msra.mxu0 0
        %695 = vmatpush.bf16.msra.mxu0 0
        %696 = vmatpush.bf16.msra.mxu0 0
        %697 = vmatpush.bf16.msra.mxu0 0
        %698 = vmatpush.bf16.msra.mxu0 %v681
        %699 = vmatpush.bf16.msra.mxu0 %v665
        %700 = vmatmul.bf16.gmra.mxu0 %v678
        %v701 = vpop.f32.mrf.mxu0
        %v702 = vadd.f32 0.0, %v701
        %v703 = vpop.f32.mrf.mxu0
        %v704 = vadd.f32 0.0, %v703
        %705 = vdwg.mxu0
        %706 = vmatpush.bf16.msra.mxu0 0
        %707 = vmatpush.bf16.msra.mxu0 0
        %708 = vmatpush.bf16.msra.mxu0 0
        %709 = vmatpush.bf16.msra.mxu0 0
        %710 = vmatpush.bf16.msra.mxu0 0
        %711 = vmatpush.bf16.msra.mxu0 0
        %712 = vmatpush.bf16.msra.mxu0 %v684
        %713 = vmatpush.bf16.msra.mxu0 %v666
        %714 = vmatmul.bf16.gmra.mxu0 %v678
        %v715 = vpop.f32.mrf.mxu0
        %v716 = vadd.f32 0.0, %v715
        %v717 = vpop.f32.mrf.mxu0
        %v718 = vadd.f32 0.0, %v717
        %719 = vdwg.mxu0
        %720 = vmatpush.bf16.msra.mxu0 0
        %721 = vmatpush.bf16.msra.mxu0 0
        %722 = vmatpush.bf16.msra.mxu0 0
        %723 = vmatpush.bf16.msra.mxu0 0
        %724 = vmatpush.bf16.msra.mxu0 0
        %725 = vmatpush.bf16.msra.mxu0 0
        %726 = vmatpush.bf16.msra.mxu0 %v687
        %727 = vmatpush.bf16.msra.mxu0 %v667
        %728 = vmatmul.bf16.gmra.mxu0 %v678
        %v729 = vpop.f32.mrf.mxu0
        %v730 = vadd.f32 0.0, %v729
        %v731 = vpop.f32.mrf.mxu0
        %v732 = vadd.f32 0.0, %v731
        %733 = vdwg.mxu0
        %734 = vmatpush.bf16.msra.mxu0 0
        %735 = vmatpush.bf16.msra.mxu0 0
        %736 = vmatpush.bf16.msra.mxu0 0
        %737 = vmatpush.bf16.msra.mxu0 0
        %738 = vmatpush.bf16.msra.mxu0 0
        %739 = vmatpush.bf16.msra.mxu0 0
        %740 = vmatpush.bf16.msra.mxu0 %v690
        %741 = vmatpush.bf16.msra.mxu0 %v668
        %742 = vmatmul.bf16.gmra.mxu0 %v678
        %v743 = vpop.f32.mrf.mxu0
        %v744 = vadd.f32 0.0, %v743
        %v745 = vpop.f32.mrf.mxu0
        %v746 = vadd.f32 0.0, %v745
        %747 = vdwg.mxu0
        %v748 = vadd.f32 %v610, %v702
        %v749 = vadd.f32 %v611, %v716
        %v750 = vadd.f32 %v612, %v730
        %v751 = vadd.f32 %v613, %v744
        %v752 = vadd.f32 %v614, %v704
        %v753 = vadd.f32 %v615, %v718
        %v754 = vadd.f32 %v616, %v732
        %v755 = vadd.f32 %v617, %v746
        %v756 = vld [vmem:[%s251] sm:$0xc]
        %s757 = scalar_lea.vmem %s1, 192
        %v758 = vld [vmem:[%s757] sm:$0xff]
        %v759 = vld [vmem:[%s757 + $0x8] sm:$0xff]
        %v760 = vld [vmem:[%s757 + $0x10] sm:$0xff]
        %v761 = vld [vmem:[%s757 + $0x18] sm:$0xff]
        %v762 = vld [vmem:[%s757 + $0x20] sm:$0xff]
        %v763 = vld [vmem:[%s757 + $0x28] sm:$0xff]
        %v765 = vunpack.c.l.b16 %v756
        %v766 = vpack.c.b16 %v274, %v765
        %vm767 = vcmask 1045504
        %v768 = vrot.slane %v766, 2
        %v769 = vrot.slane %v628, 2
        %v770 = vsel %vm767, %v768, %v769
        %v777 = vunpack.c.l.b16 %v758
        %v778 = vunpack.c.h.b16 %v758
        %v779 = vunpack.c.l.b16 %v759
        %v780 = vunpack.c.h.b16 %v759
        %v781 = vunpack.c.l.b16 %v760
        %v782 = vunpack.c.h.b16 %v760
        %v783 = vunpack.c.l.b16 %v761
        %v784 = vunpack.c.h.b16 %v761
        %v785 = vunpack.c.l.b16 %v762
        %v786 = vunpack.c.h.b16 %v762
        %v787 = vunpack.c.l.b16 %v763
        %v788 = vunpack.c.h.b16 %v763
        %v789 = vpack.c.b16 %v781, %v777
        %v790 = vpack.c.b16 %v782, %v778
        %v791 = vpack.c.b16 %v783, %v779
        %v792 = vpack.c.b16 %v784, %v780
        %v793 = vpack.c.b16 %v785, %v785
        %v794 = vpack.c.b16 %v786, %v786
        %v795 = vpack.c.b16 %v787, %v787
        %v796 = vpack.c.b16 %v788, %v788
        %v802 = vsel %vm321, %v770, 0
        %v805 = vsel %vm325, %v793, 0
        %v808 = vsel %vm325, %v794, 0
        %v811 = vsel %vm325, %v795, 0
        %v814 = vsel %vm325, %v796, 0
        %816 = vmatpush.bf16.msra.mxu0 0
        %817 = vmatpush.bf16.msra.mxu0 0
        %818 = vmatpush.bf16.msra.mxu0 0
        %819 = vmatpush.bf16.msra.mxu0 0
        %820 = vmatpush.bf16.msra.mxu0 0
        %821 = vmatpush.bf16.msra.mxu0 0
        %822 = vmatpush.bf16.msra.mxu0 %v805
        %823 = vmatpush.bf16.msra.mxu0 %v789
        %824 = vmatmul.bf16.gmra.mxu0 %v802
        %v825 = vpop.f32.mrf.mxu0
        %v826 = vadd.f32 0.0, %v825
        %v827 = vpop.f32.mrf.mxu0
        %v828 = vadd.f32 0.0, %v827
        %829 = vdwg.mxu0
        %830 = vmatpush.bf16.msra.mxu0 0
        %831 = vmatpush.bf16.msra.mxu0 0
        %832 = vmatpush.bf16.msra.mxu0 0
        %833 = vmatpush.bf16.msra.mxu0 0
        %834 = vmatpush.bf16.msra.mxu0 0
        %835 = vmatpush.bf16.msra.mxu0 0
        %836 = vmatpush.bf16.msra.mxu0 %v808
        %837 = vmatpush.bf16.msra.mxu0 %v790
        %838 = vmatmul.bf16.gmra.mxu0 %v802
        %v839 = vpop.f32.mrf.mxu0
        %v840 = vadd.f32 0.0, %v839
        %v841 = vpop.f32.mrf.mxu0
        %v842 = vadd.f32 0.0, %v841
        %843 = vdwg.mxu0
        %844 = vmatpush.bf16.msra.mxu0 0
        %845 = vmatpush.bf16.msra.mxu0 0
        %846 = vmatpush.bf16.msra.mxu0 0
        %847 = vmatpush.bf16.msra.mxu0 0
        %848 = vmatpush.bf16.msra.mxu0 0
        %849 = vmatpush.bf16.msra.mxu0 0
        %850 = vmatpush.bf16.msra.mxu0 %v811
        %851 = vmatpush.bf16.msra.mxu0 %v791
        %852 = vmatmul.bf16.gmra.mxu0 %v802
        %v853 = vpop.f32.mrf.mxu0
        %v854 = vadd.f32 0.0, %v853
        %v855 = vpop.f32.mrf.mxu0
        %v856 = vadd.f32 0.0, %v855
        %857 = vdwg.mxu0
        %858 = vmatpush.bf16.msra.mxu0 0
        %859 = vmatpush.bf16.msra.mxu0 0
        %860 = vmatpush.bf16.msra.mxu0 0
        %861 = vmatpush.bf16.msra.mxu0 0
        %862 = vmatpush.bf16.msra.mxu0 0
        %863 = vmatpush.bf16.msra.mxu0 0
        %864 = vmatpush.bf16.msra.mxu0 %v814
        %865 = vmatpush.bf16.msra.mxu0 %v792
        %866 = vmatmul.bf16.gmra.mxu0 %v802
        %v867 = vpop.f32.mrf.mxu0
        %v868 = vadd.f32 0.0, %v867
        %v869 = vpop.f32.mrf.mxu0
        %v870 = vadd.f32 0.0, %v869
        %871 = vdwg.mxu0
        %v872 = vadd.f32 %v748, %v826
        %v873 = vadd.f32 %v749, %v840
        %v874 = vadd.f32 %v750, %v854
        %v875 = vadd.f32 %v751, %v868
        %v876 = vadd.f32 %v752, %v828
        %v877 = vadd.f32 %v753, %v842
        %v878 = vadd.f32 %v754, %v856
        %v879 = vadd.f32 %v755, %v870
        %v880 = vld [vmem:[%s251 + $0x8] sm:$0x7]
        %s881 = scalar_lea.vmem %s1, 240
        %v882 = vld [vmem:[%s881] sm:$0xff]
        %v883 = vld [vmem:[%s881 + $0x8] sm:$0xff]
        %v884 = vld [vmem:[%s881 + $0x10] sm:$0xff]
        %v885 = vld [vmem:[%s881 + $0x18] sm:$0xff]
        %v886 = vld [vmem:[%s881 + $0x20] sm:$0xff]
        %v887 = vld [vmem:[%s881 + $0x28] sm:$0xff]
        %v889 = vunpack.c.l.b16 %v880
        %v890 = vpack.c.b16 %v889, %v889
        %vm891 = vsmask.f32 5376
        %v893 = vshrl.u32 %v766, 16
        %v895 = vrot.slane %v893, 2
        %v896 = vshll.u32 %v766, 16
        %v898 = vrot.slane %v896, 3
        %v899 = vor.u32 %v895, %v898
        %v901 = vshrl.u32 %v890, 16
        %v903 = vrot.slane %v901, 2
        %v904 = vshll.u32 %v890, 16
        %v906 = vrot.slane %v904, 3
        %v907 = vor.u32 %v903, %v906
        %v908 = vsel %vm891, %v899, %v907
        %v915 = vunpack.c.l.b16 %v882
        %v916 = vunpack.c.h.b16 %v882
        %v917 = vunpack.c.l.b16 %v883
        %v918 = vunpack.c.h.b16 %v883
        %v919 = vunpack.c.l.b16 %v884
        %v920 = vunpack.c.h.b16 %v884
        %v921 = vunpack.c.l.b16 %v885
        %v922 = vunpack.c.h.b16 %v885
        %v923 = vunpack.c.l.b16 %v886
        %v924 = vunpack.c.h.b16 %v886
        %v925 = vunpack.c.l.b16 %v887
        %v926 = vunpack.c.h.b16 %v887
        %v927 = vpack.c.b16 %v919, %v915
        %v928 = vpack.c.b16 %v920, %v916
        %v929 = vpack.c.b16 %v921, %v917
        %v930 = vpack.c.b16 %v922, %v918
        %v931 = vpack.c.b16 %v923, %v923
        %v932 = vpack.c.b16 %v924, %v924
        %v933 = vpack.c.b16 %v925, %v925
        %v934 = vpack.c.b16 %v926, %v926
        %v940 = vsel %vm321, %v908, 0
        %v943 = vsel %vm325, %v931, 0
        %v946 = vsel %vm325, %v932, 0
        %v949 = vsel %vm325, %v933, 0
        %v952 = vsel %vm325, %v934, 0
        %954 = vmatpush.bf16.msra.mxu0 0
        %955 = vmatpush.bf16.msra.mxu0 0
        %956 = vmatpush.bf16.msra.mxu0 0
        %957 = vmatpush.bf16.msra.mxu0 0
        %958 = vmatpush.bf16.msra.mxu0 0
        %959 = vmatpush.bf16.msra.mxu0 0
        %960 = vmatpush.bf16.msra.mxu0 %v943
        %961 = vmatpush.bf16.msra.mxu0 %v927
        %962 = vmatmul.bf16.gmra.mxu0 %v940
        %v963 = vpop.f32.mrf.mxu0
        %v964 = vadd.f32 0.0, %v963
        %v965 = vpop.f32.mrf.mxu0
        %v966 = vadd.f32 0.0, %v965
        %967 = vdwg.mxu0
        %968 = vmatpush.bf16.msra.mxu0 0
        %969 = vmatpush.bf16.msra.mxu0 0
        %970 = vmatpush.bf16.msra.mxu0 0
        %971 = vmatpush.bf16.msra.mxu0 0
        %972 = vmatpush.bf16.msra.mxu0 0
        %973 = vmatpush.bf16.msra.mxu0 0
        %974 = vmatpush.bf16.msra.mxu0 %v946
        %975 = vmatpush.bf16.msra.mxu0 %v928
        %976 = vmatmul.bf16.gmra.mxu0 %v940
        %v977 = vpop.f32.mrf.mxu0
        %v978 = vadd.f32 0.0, %v977
        %v979 = vpop.f32.mrf.mxu0
        %v980 = vadd.f32 0.0, %v979
        %981 = vdwg.mxu0
        %982 = vmatpush.bf16.msra.mxu0 0
        %983 = vmatpush.bf16.msra.mxu0 0
        %984 = vmatpush.bf16.msra.mxu0 0
        %985 = vmatpush.bf16.msra.mxu0 0
        %986 = vmatpush.bf16.msra.mxu0 0
        %987 = vmatpush.bf16.msra.mxu0 0
        %988 = vmatpush.bf16.msra.mxu0 %v949
        %989 = vmatpush.bf16.msra.mxu0 %v929
        %990 = vmatmul.bf16.gmra.mxu0 %v940
        %v991 = vpop.f32.mrf.mxu0
        %v992 = vadd.f32 0.0, %v991
        %v993 = vpop.f32.mrf.mxu0
        %v994 = vadd.f32 0.0, %v993
        %995 = vdwg.mxu0
        %996 = vmatpush.bf16.msra.mxu0 0
        %997 = vmatpush.bf16.msra.mxu0 0
        %998 = vmatpush.bf16.msra.mxu0 0
        %999 = vmatpush.bf16.msra.mxu0 0
        %1000 = vmatpush.bf16.msra.mxu0 0
        %1001 = vmatpush.bf16.msra.mxu0 0
        %1002 = vmatpush.bf16.msra.mxu0 %v952
        %1003 = vmatpush.bf16.msra.mxu0 %v930
        %1004 = vmatmul.bf16.gmra.mxu0 %v940
        %v1005 = vpop.f32.mrf.mxu0
        %v1006 = vadd.f32 0.0, %v1005
        %v1007 = vpop.f32.mrf.mxu0
        %v1008 = vadd.f32 0.0, %v1007
        %1009 = vdwg.mxu0
        %v1010 = vadd.f32 %v872, %v964
        %v1011 = vadd.f32 %v873, %v978
        %v1012 = vadd.f32 %v874, %v992
        %v1013 = vadd.f32 %v875, %v1006
        %v1014 = vadd.f32 %v876, %v966
        %v1015 = vadd.f32 %v877, %v980
        %v1016 = vadd.f32 %v878, %v994
        %v1017 = vadd.f32 %v879, %v1008
        %v1018 = vld [vmem:[%s251] sm:$0x8]
        %s1019 = scalar_lea.vmem %s1, 288
        %v1020 = vld [vmem:[%s1019] sm:$0xff]
        %v1021 = vld [vmem:[%s1019 + $0x8] sm:$0xff]
        %v1022 = vld [vmem:[%s1019 + $0x10] sm:$0xff]
        %v1023 = vld [vmem:[%s1019 + $0x18] sm:$0xff]
        %v1024 = vld [vmem:[%s1019 + $0x20] sm:$0xff]
        %v1025 = vld [vmem:[%s1019 + $0x28] sm:$0xff]
        %v1027 = vunpack.c.l.b16 %v1018
        %v1028 = vpack.c.b16 %v274, %v1027
        %vm1029 = vcmask 1044480
        %v1030 = vrot.slane %v1028, 3
        %v1031 = vrot.slane %v890, 3
        %v1032 = vsel %vm1029, %v1030, %v1031
        %v1039 = vunpack.c.l.b16 %v1020
        %v1040 = vunpack.c.h.b16 %v1020
        %v1041 = vunpack.c.l.b16 %v1021
        %v1042 = vunpack.c.h.b16 %v1021
        %v1043 = vunpack.c.l.b16 %v1022
        %v1044 = vunpack.c.h.b16 %v1022
        %v1045 = vunpack.c.l.b16 %v1023
        %v1046 = vunpack.c.h.b16 %v1023
        %v1047 = vunpack.c.l.b16 %v1024
        %v1048 = vunpack.c.h.b16 %v1024
        %v1049 = vunpack.c.l.b16 %v1025
        %v1050 = vunpack.c.h.b16 %v1025
        %v1051 = vpack.c.b16 %v1043, %v1039
        %v1052 = vpack.c.b16 %v1044, %v1040
        %v1053 = vpack.c.b16 %v1045, %v1041
        %v1054 = vpack.c.b16 %v1046, %v1042
        %v1055 = vpack.c.b16 %v1047, %v1047
        %v1056 = vpack.c.b16 %v1048, %v1048
        %v1057 = vpack.c.b16 %v1049, %v1049
        %v1058 = vpack.c.b16 %v1050, %v1050
        %v1064 = vsel %vm321, %v1032, 0
        %v1067 = vsel %vm325, %v1055, 0
        %v1070 = vsel %vm325, %v1056, 0
        %v1073 = vsel %vm325, %v1057, 0
        %v1076 = vsel %vm325, %v1058, 0
        %1078 = vmatpush.bf16.msra.mxu0 0
        %1079 = vmatpush.bf16.msra.mxu0 0
        %1080 = vmatpush.bf16.msra.mxu0 0
        %1081 = vmatpush.bf16.msra.mxu0 0
        %1082 = vmatpush.bf16.msra.mxu0 0
        %1083 = vmatpush.bf16.msra.mxu0 0
        %1084 = vmatpush.bf16.msra.mxu0 %v1067
        %1085 = vmatpush.bf16.msra.mxu0 %v1051
        %1086 = vmatmul.bf16.gmra.mxu0 %v1064
        %v1087 = vpop.f32.mrf.mxu0
        %v1088 = vadd.f32 0.0, %v1087
        %v1089 = vpop.f32.mrf.mxu0
        %v1090 = vadd.f32 0.0, %v1089
        %1091 = vdwg.mxu0
        %1092 = vmatpush.bf16.msra.mxu0 0
        %1093 = vmatpush.bf16.msra.mxu0 0
        %1094 = vmatpush.bf16.msra.mxu0 0
        %1095 = vmatpush.bf16.msra.mxu0 0
        %1096 = vmatpush.bf16.msra.mxu0 0
        %1097 = vmatpush.bf16.msra.mxu0 0
        %1098 = vmatpush.bf16.msra.mxu0 %v1070
        %1099 = vmatpush.bf16.msra.mxu0 %v1052
        %1100 = vmatmul.bf16.gmra.mxu0 %v1064
        %v1101 = vpop.f32.mrf.mxu0
        %v1102 = vadd.f32 0.0, %v1101
        %v1103 = vpop.f32.mrf.mxu0
        %v1104 = vadd.f32 0.0, %v1103
        %1105 = vdwg.mxu0
        %1106 = vmatpush.bf16.msra.mxu0 0
        %1107 = vmatpush.bf16.msra.mxu0 0
        %1108 = vmatpush.bf16.msra.mxu0 0
        %1109 = vmatpush.bf16.msra.mxu0 0
        %1110 = vmatpush.bf16.msra.mxu0 0
        %1111 = vmatpush.bf16.msra.mxu0 0
        %1112 = vmatpush.bf16.msra.mxu0 %v1073
        %1113 = vmatpush.bf16.msra.mxu0 %v1053
        %1114 = vmatmul.bf16.gmra.mxu0 %v1064
        %v1115 = vpop.f32.mrf.mxu0
        %v1116 = vadd.f32 0.0, %v1115
        %v1117 = vpop.f32.mrf.mxu0
        %v1118 = vadd.f32 0.0, %v1117
        %1119 = vdwg.mxu0
        %1120 = vmatpush.bf16.msra.mxu0 0
        %1121 = vmatpush.bf16.msra.mxu0 0
        %1122 = vmatpush.bf16.msra.mxu0 0
        %1123 = vmatpush.bf16.msra.mxu0 0
        %1124 = vmatpush.bf16.msra.mxu0 0
        %1125 = vmatpush.bf16.msra.mxu0 0
        %1126 = vmatpush.bf16.msra.mxu0 %v1076
        %1127 = vmatpush.bf16.msra.mxu0 %v1054
        %1128 = vmatmul.bf16.gmra.mxu0 %v1064
        %v1129 = vpop.f32.mrf.mxu0
        %v1130 = vadd.f32 0.0, %v1129
        %v1131 = vpop.f32.mrf.mxu0
        %v1132 = vadd.f32 0.0, %v1131
        %1133 = vdwg.mxu0
        %v1134 = vadd.f32 %v1010, %v1088
        %v1135 = vadd.f32 %v1011, %v1102
        %v1136 = vadd.f32 %v1012, %v1116
        %v1137 = vadd.f32 %v1013, %v1130
        %v1138 = vadd.f32 %v1014, %v1090
        %v1139 = vadd.f32 %v1015, %v1104
        %v1140 = vadd.f32 %v1016, %v1118
        %v1141 = vadd.f32 %v1017, %v1132
        %v1142 = vld [vmem:[%s251 + $0x8] sm:$0xf]
        %s1143 = scalar_lea.vmem %s1, 336
        %v1144 = vld [vmem:[%s1143] sm:$0xff]
        %v1145 = vld [vmem:[%s1143 + $0x8] sm:$0xff]
        %v1146 = vld [vmem:[%s1143 + $0x10] sm:$0xff]
        %v1147 = vld [vmem:[%s1143 + $0x18] sm:$0xff]
        %v1148 = vld [vmem:[%s1143 + $0x20] sm:$0xff]
        %v1149 = vld [vmem:[%s1143 + $0x28] sm:$0xff]
        %v1151 = vunpack.c.l.b16 %v1142
        %v1152 = vpack.c.b16 %v1151, %v1151
        %vm1153 = vsmask.f32 4352
        %v1155 = vshrl.u32 %v1028, 16
        %v1157 = vrot.slane %v1155, 3
        %v1158 = vshll.u32 %v1028, 16
        %v1160 = vrot.slane %v1158, 4
        %v1161 = vor.u32 %v1157, %v1160
        %v1163 = vshrl.u32 %v1152, 16
        %v1165 = vrot.slane %v1163, 3
        %v1166 = vshll.u32 %v1152, 16
        %v1168 = vrot.slane %v1166, 4
        %v1169 = vor.u32 %v1165, %v1168
        %v1170 = vsel %vm1153, %v1161, %v1169
        %v1177 = vunpack.c.l.b16 %v1144
        %v1178 = vunpack.c.h.b16 %v1144
        %v1179 = vunpack.c.l.b16 %v1145
        %v1180 = vunpack.c.h.b16 %v1145
        %v1181 = vunpack.c.l.b16 %v1146
        %v1182 = vunpack.c.h.b16 %v1146
        %v1183 = vunpack.c.l.b16 %v1147
        %v1184 = vunpack.c.h.b16 %v1147
        %v1185 = vunpack.c.l.b16 %v1148
        %v1186 = vunpack.c.h.b16 %v1148
        %v1187 = vunpack.c.l.b16 %v1149
        %v1188 = vunpack.c.h.b16 %v1149
        %v1189 = vpack.c.b16 %v1181, %v1177
        %v1190 = vpack.c.b16 %v1182, %v1178
        %v1191 = vpack.c.b16 %v1183, %v1179
        %v1192 = vpack.c.b16 %v1184, %v1180
        %v1193 = vpack.c.b16 %v1185, %v1185
        %v1194 = vpack.c.b16 %v1186, %v1186
        %v1195 = vpack.c.b16 %v1187, %v1187
        %v1196 = vpack.c.b16 %v1188, %v1188
        %v1202 = vsel %vm321, %v1170, 0
        %v1205 = vsel %vm325, %v1193, 0
        %v1208 = vsel %vm325, %v1194, 0
        %v1211 = vsel %vm325, %v1195, 0
        %v1214 = vsel %vm325, %v1196, 0
        %1216 = vmatpush.bf16.msra.mxu0 0
        %1217 = vmatpush.bf16.msra.mxu0 0
        %1218 = vmatpush.bf16.msra.mxu0 0
        %1219 = vmatpush.bf16.msra.mxu0 0
        %1220 = vmatpush.bf16.msra.mxu0 0
        %1221 = vmatpush.bf16.msra.mxu0 0
        %1222 = vmatpush.bf16.msra.mxu0 %v1205
        %1223 = vmatpush.bf16.msra.mxu0 %v1189
        %1224 = vmatmul.bf16.gmra.mxu0 %v1202
        %v1225 = vpop.f32.mrf.mxu0
        %v1226 = vadd.f32 0.0, %v1225
        %v1227 = vpop.f32.mrf.mxu0
        %v1228 = vadd.f32 0.0, %v1227
        %1229 = vdwg.mxu0
        %1230 = vmatpush.bf16.msra.mxu0 0
        %1231 = vmatpush.bf16.msra.mxu0 0
        %1232 = vmatpush.bf16.msra.mxu0 0
        %1233 = vmatpush.bf16.msra.mxu0 0
        %1234 = vmatpush.bf16.msra.mxu0 0
        %1235 = vmatpush.bf16.msra.mxu0 0
        %1236 = vmatpush.bf16.msra.mxu0 %v1208
        %1237 = vmatpush.bf16.msra.mxu0 %v1190
        %1238 = vmatmul.bf16.gmra.mxu0 %v1202
        %v1239 = vpop.f32.mrf.mxu0
        %v1240 = vadd.f32 0.0, %v1239
        %v1241 = vpop.f32.mrf.mxu0
        %v1242 = vadd.f32 0.0, %v1241
        %1243 = vdwg.mxu0
        %1244 = vmatpush.bf16.msra.mxu0 0
        %1245 = vmatpush.bf16.msra.mxu0 0
        %1246 = vmatpush.bf16.msra.mxu0 0
        %1247 = vmatpush.bf16.msra.mxu0 0
        %1248 = vmatpush.bf16.msra.mxu0 0
        %1249 = vmatpush.bf16.msra.mxu0 0
        %1250 = vmatpush.bf16.msra.mxu0 %v1211
        %1251 = vmatpush.bf16.msra.mxu0 %v1191
        %1252 = vmatmul.bf16.gmra.mxu0 %v1202
        %v1253 = vpop.f32.mrf.mxu0
        %v1254 = vadd.f32 0.0, %v1253
        %v1255 = vpop.f32.mrf.mxu0
        %v1256 = vadd.f32 0.0, %v1255
        %1257 = vdwg.mxu0
        %1258 = vmatpush.bf16.msra.mxu0 0
        %1259 = vmatpush.bf16.msra.mxu0 0
        %1260 = vmatpush.bf16.msra.mxu0 0
        %1261 = vmatpush.bf16.msra.mxu0 0
        %1262 = vmatpush.bf16.msra.mxu0 0
        %1263 = vmatpush.bf16.msra.mxu0 0
        %1264 = vmatpush.bf16.msra.mxu0 %v1214
        %1265 = vmatpush.bf16.msra.mxu0 %v1192
        %1266 = vmatmul.bf16.gmra.mxu0 %v1202
        %v1267 = vpop.f32.mrf.mxu0
        %v1268 = vadd.f32 0.0, %v1267
        %v1269 = vpop.f32.mrf.mxu0
        %v1270 = vadd.f32 0.0, %v1269
        %1271 = vdwg.mxu0
        %v1272 = vadd.f32 %v1134, %v1226
        %v1273 = vadd.f32 %v1135, %v1240
        %v1274 = vadd.f32 %v1136, %v1254
        %v1275 = vadd.f32 %v1137, %v1268
        %v1276 = vadd.f32 %v1138, %v1228
        %v1277 = vadd.f32 %v1139, %v1242
        %v1278 = vadd.f32 %v1140, %v1256
        %v1279 = vadd.f32 %v1141, %v1270
        %s1280 = scalar_lea.vmem %s1, 384
        %v1281 = vld [vmem:[%s1280] sm:$0xff]
        %v1282 = vld [vmem:[%s1280 + $0x8] sm:$0xff]
        %v1283 = vld [vmem:[%s1280 + $0x10] sm:$0xff]
        %v1284 = vld [vmem:[%s1280 + $0x18] sm:$0xff]
        %v1285 = vld [vmem:[%s1280 + $0x20] sm:$0xff]
        %v1286 = vld [vmem:[%s1280 + $0x28] sm:$0xff]
        %v1287 = vpack.c.b16 %v1151, %v274
        %v1294 = vunpack.c.l.b16 %v1281
        %v1295 = vunpack.c.h.b16 %v1281
        %v1296 = vunpack.c.l.b16 %v1282
        %v1297 = vunpack.c.h.b16 %v1282
        %v1298 = vunpack.c.l.b16 %v1283
        %v1299 = vunpack.c.h.b16 %v1283
        %v1300 = vunpack.c.l.b16 %v1284
        %v1301 = vunpack.c.h.b16 %v1284
        %v1302 = vunpack.c.l.b16 %v1285
        %v1303 = vunpack.c.h.b16 %v1285
        %v1304 = vunpack.c.l.b16 %v1286
        %v1305 = vunpack.c.h.b16 %v1286
        %v1306 = vpack.c.b16 %v1298, %v1294
        %v1307 = vpack.c.b16 %v1299, %v1295
        %v1308 = vpack.c.b16 %v1300, %v1296
        %v1309 = vpack.c.b16 %v1301, %v1297
        %v1310 = vpack.c.b16 %v1302, %v1302
        %v1311 = vpack.c.b16 %v1303, %v1303
        %v1312 = vpack.c.b16 %v1304, %v1304
        %v1313 = vpack.c.b16 %v1305, %v1305
        %v1319 = vsel %vm321, %v1287, 0
        %v1322 = vsel %vm325, %v1310, 0
        %v1325 = vsel %vm325, %v1311, 0
        %v1328 = vsel %vm325, %v1312, 0
        %v1331 = vsel %vm325, %v1313, 0
        %1333 = vmatpush.bf16.msra.mxu0 0
        %1334 = vmatpush.bf16.msra.mxu0 0
        %1335 = vmatpush.bf16.msra.mxu0 0
        %1336 = vmatpush.bf16.msra.mxu0 0
        %1337 = vmatpush.bf16.msra.mxu0 0
        %1338 = vmatpush.bf16.msra.mxu0 0
        %1339 = vmatpush.bf16.msra.mxu0 %v1322
        %1340 = vmatpush.bf16.msra.mxu0 %v1306
        %1341 = vmatmul.bf16.gmra.mxu0 %v1319
        %v1342 = vpop.f32.mrf.mxu0
        %v1343 = vadd.f32 0.0, %v1342
        %v1344 = vpop.f32.mrf.mxu0
        %v1345 = vadd.f32 0.0, %v1344
        %1346 = vdwg.mxu0
        %1347 = vmatpush.bf16.msra.mxu0 0
        %1348 = vmatpush.bf16.msra.mxu0 0
        %1349 = vmatpush.bf16.msra.mxu0 0
        %1350 = vmatpush.bf16.msra.mxu0 0
        %1351 = vmatpush.bf16.msra.mxu0 0
        %1352 = vmatpush.bf16.msra.mxu0 0
        %1353 = vmatpush.bf16.msra.mxu0 %v1325
        %1354 = vmatpush.bf16.msra.mxu0 %v1307
        %1355 = vmatmul.bf16.gmra.mxu0 %v1319
        %v1356 = vpop.f32.mrf.mxu0
        %v1357 = vadd.f32 0.0, %v1356
        %v1358 = vpop.f32.mrf.mxu0
        %v1359 = vadd.f32 0.0, %v1358
        %1360 = vdwg.mxu0
        %1361 = vmatpush.bf16.msra.mxu0 0
        %1362 = vmatpush.bf16.msra.mxu0 0
        %1363 = vmatpush.bf16.msra.mxu0 0
        %1364 = vmatpush.bf16.msra.mxu0 0
        %1365 = vmatpush.bf16.msra.mxu0 0
        %1366 = vmatpush.bf16.msra.mxu0 0
        %1367 = vmatpush.bf16.msra.mxu0 %v1328
        %1368 = vmatpush.bf16.msra.mxu0 %v1308
        %1369 = vmatmul.bf16.gmra.mxu0 %v1319
        %v1370 = vpop.f32.mrf.mxu0
        %v1371 = vadd.f32 0.0, %v1370
        %v1372 = vpop.f32.mrf.mxu0
        %v1373 = vadd.f32 0.0, %v1372
        %1374 = vdwg.mxu0
        %1375 = vmatpush.bf16.msra.mxu0 0
        %1376 = vmatpush.bf16.msra.mxu0 0
        %1377 = vmatpush.bf16.msra.mxu0 0
        %1378 = vmatpush.bf16.msra.mxu0 0
        %1379 = vmatpush.bf16.msra.mxu0 0
        %1380 = vmatpush.bf16.msra.mxu0 0
        %1381 = vmatpush.bf16.msra.mxu0 %v1331
        %1382 = vmatpush.bf16.msra.mxu0 %v1309
        %1383 = vmatmul.bf16.gmra.mxu0 %v1319
        %v1384 = vpop.f32.mrf.mxu0
        %v1385 = vadd.f32 0.0, %v1384
        %v1386 = vpop.f32.mrf.mxu0
        %v1387 = vadd.f32 0.0, %v1386
        %1388 = vdwg.mxu0
        %v1389 = vadd.f32 %v1272, %v1343
        %v1390 = vadd.f32 %v1273, %v1357
        %v1391 = vadd.f32 %v1274, %v1371
        %v1392 = vadd.f32 %v1275, %v1385
        %v1393 = vadd.f32 %v1276, %v1345
        %v1394 = vadd.f32 %v1277, %v1359
        %v1395 = vadd.f32 %v1278, %v1373
        %v1396 = vadd.f32 %v1279, %v1387
        %v1397 = vld [vmem:[%s2] sm:$0xf]
        %v1399 = vperm.slane %v1397, 0
        %v1400 = vperm.slane %v1397, 1
        %v1401 = vperm.slane %v1397, 2
        %v1402 = vperm.slane %v1397, 3
        %v1407 = vadd.f32 %v1389, %v1399
        %v1408 = vadd.f32 %v1390, %v1400
        %v1409 = vadd.f32 %v1391, %v1401
        %v1410 = vadd.f32 %v1392, %v1402
        %v1411 = vadd.f32 %v1393, %v1399
        %v1412 = vadd.f32 %v1394, %v1400
        %v1413 = vadd.f32 %v1395, %v1401
        %v1414 = vadd.f32 %v1396, %v1402
        %v1415 = vmax.f32 %v1407, 0.0
        %v1416 = vmax.f32 %v1408, 0.0
        %v1417 = vmax.f32 %v1409, 0.0
        %v1418 = vmax.f32 %v1410, 0.0
        %v1419 = vmax.f32 %v1411, 0.0
        %v1420 = vmax.f32 %v1412, 0.0
        %v1421 = vmax.f32 %v1413, 0.0
        %v1422 = vmax.f32 %v1414, 0.0
        %v1423 = vld [vmem:[%s3] sm:$0xff]
        %v1424 = vld [vmem:[%s3 + $0x8] sm:$0xff]
        %v1425 = vld [vmem:[%s3 + $0x10] sm:$0xff]
        %v1426 = vld [vmem:[%s3 + $0x18] sm:$0xff]
        %v1427 = vld [vmem:[%s3 + $0x20] sm:$0xff]
        %v1428 = vld [vmem:[%s3 + $0x28] sm:$0xff]
        %v1429 = vld [vmem:[%s3 + $0x30] sm:$0xff]
        %v1430 = vld [vmem:[%s3 + $0x38] sm:$0xff]
        %v1431 = vld [vmem:[%s3 + $0x40] sm:$0xff]
        %v1432 = vld [vmem:[%s3 + $0x48] sm:$0xff]
        %v1433 = vld [vmem:[%s3 + $0x50] sm:$0xff]
        %v1434 = vld [vmem:[%s3 + $0x58] sm:$0xff]
        %v1435 = vld [vmem:[%s3 + $0x60] sm:$0xff]
        %v1436 = vld [vmem:[%s3 + $0x68] sm:$0xff]
        %v1437 = vld [vmem:[%s3 + $0x70] sm:$0xff]
        %v1438 = vld [vmem:[%s3 + $0x78] sm:$0xff]
        %v1439 = vld [vmem:[%s3 + $0x80] sm:$0xff]
        %v1440 = vld [vmem:[%s3 + $0x88] sm:$0xff]
        %v1441 = vld [vmem:[%s3 + $0x90] sm:$0xff]
        %v1442 = vld [vmem:[%s3 + $0x98] sm:$0xff]
        %v1443 = vld [vmem:[%s3 + $0xa0] sm:$0xff]
        %v1444 = vld [vmem:[%s3 + $0xa8] sm:$0xff]
        %v1445 = vld [vmem:[%s3 + $0xb0] sm:$0xff]
        %v1446 = vld [vmem:[%s3 + $0xb8] sm:$0xff]
        %v1447 = vld [vmem:[%s3 + $0xc0] sm:$0xff]
        %v1448 = vld [vmem:[%s3 + $0xc8] sm:$0xff]
        %v1449 = vld [vmem:[%s3 + $0xd0] sm:$0xff]
        %v1450 = vld [vmem:[%s3 + $0xd8] sm:$0xff]
        %v1451 = vld [vmem:[%s3 + $0xe0] sm:$0xff]
        %v1452 = vld [vmem:[%s3 + $0xe8] sm:$0xff]
        %v1453 = vld [vmem:[%s3 + $0xf0] sm:$0xff]
        %v1454 = vld [vmem:[%s3 + $0xf8] sm:$0xff]
        %v1455 = vld [vmem:[%s3 + $0x100] sm:$0xff]
        %v1456 = vld [vmem:[%s3 + $0x108] sm:$0xff]
        %v1457 = vld [vmem:[%s3 + $0x110] sm:$0xff]
        %v1458 = vld [vmem:[%s3 + $0x118] sm:$0xff]
        %v1459 = vld [vmem:[%s3 + $0x120] sm:$0xff]
        %v1460 = vld [vmem:[%s3 + $0x128] sm:$0xff]
        %v1461 = vld [vmem:[%s3 + $0x130] sm:$0xff]
        %v1462 = vld [vmem:[%s3 + $0x138] sm:$0xff]
        %v1463 = vld [vmem:[%s3 + $0x140] sm:$0xff]
        %v1464 = vld [vmem:[%s3 + $0x148] sm:$0xff]
        %v1465 = vld [vmem:[%s3 + $0x150] sm:$0xff]
        %v1466 = vld [vmem:[%s3 + $0x158] sm:$0xff]
        %v1467 = vld [vmem:[%s3 + $0x160] sm:$0xff]
        %v1468 = vld [vmem:[%s3 + $0x168] sm:$0xff]
        %v1469 = vld [vmem:[%s3 + $0x170] sm:$0xff]
        %v1470 = vld [vmem:[%s3 + $0x178] sm:$0xff]
        %v1471 = vld [vmem:[%s3 + $0x180] sm:$0xff]
        %v1472 = vld [vmem:[%s3 + $0x188] sm:$0xff]
        %v1473 = vld [vmem:[%s3 + $0x190] sm:$0xff]
        %v1474 = vld [vmem:[%s3 + $0x198] sm:$0xff]
        %v1475 = vld [vmem:[%s3 + $0x1a0] sm:$0xff]
        %v1476 = vld [vmem:[%s3 + $0x1a8] sm:$0xff]
        %v1477 = vld [vmem:[%s3 + $0x1b0] sm:$0xff]
        %v1478 = vld [vmem:[%s3 + $0x1b8] sm:$0xff]
        %v1479 = vld [vmem:[%s3 + $0x1c0] sm:$0xff]
        %v1480 = vld [vmem:[%s3 + $0x1c8] sm:$0xff]
        %v1481 = vld [vmem:[%s3 + $0x1d0] sm:$0xff]
        %v1482 = vld [vmem:[%s3 + $0x1d8] sm:$0xff]
        %v1483 = vstv %s253
        %vm1484 = vcmask 785408
        %v1486 = vsel %vm1484, %v1418, 0
        %v1489 = vsel %vm1484, %v1422, 0
        %1491 = vmatpush.msra.mxu0 %v1438
        %1492 = vmatpush.msra.mxu0 %v1437
        %1493 = vmatpush.msra.mxu0 %v1436
        %1494 = vmatpush.msra.mxu0 %v1435
        %1495 = vmatpush.msra.mxu0 %v1434
        %1496 = vmatpush.msra.mxu0 %v1433
        %1497 = vmatpush.msra.mxu0 %v1432
        %1498 = vmatpush.msra.mxu0 %v1431
        %1499 = vmatpush.msra.mxu0 %v1430
        %1500 = vmatpush.msra.mxu0 %v1429
        %1501 = vmatpush.msra.mxu0 %v1428
        %1502 = vmatpush.msra.mxu0 %v1427
        %1503 = vmatpush.msra.mxu0 %v1426
        %1504 = vmatpush.msra.mxu0 %v1425
        %1505 = vmatpush.msra.mxu0 %v1424
        %1506 = vmatpush.msra.mxu0 %v1423
        %1507 = vmatmul.f32.gmra.mxu0 %v1415
        %v1508 = vpop.f32.mrf.mxu0
        %v1509 = vadd.f32 %v1483, %v1508
        %1510 = vmatmul.f32.gmra.mxu0 %v1419
        %v1511 = vpop.f32.mrf.mxu0
        %v1512 = vadd.f32 %v1483, %v1511
        %1513 = vdwg.mxu0
        %1514 = vmatpush.msra.mxu0 %v1454
        %1515 = vmatpush.msra.mxu0 %v1453
        %1516 = vmatpush.msra.mxu0 %v1452
        %1517 = vmatpush.msra.mxu0 %v1451
        %1518 = vmatpush.msra.mxu0 %v1450
        %1519 = vmatpush.msra.mxu0 %v1449
        %1520 = vmatpush.msra.mxu0 %v1448
        %1521 = vmatpush.msra.mxu0 %v1447
        %1522 = vmatpush.msra.mxu0 %v1446
        %1523 = vmatpush.msra.mxu0 %v1445
        %1524 = vmatpush.msra.mxu0 %v1444
        %1525 = vmatpush.msra.mxu0 %v1443
        %1526 = vmatpush.msra.mxu0 %v1442
        %1527 = vmatpush.msra.mxu0 %v1441
        %1528 = vmatpush.msra.mxu0 %v1440
        %1529 = vmatpush.msra.mxu0 %v1439
        %1530 = vmatmul.f32.gmra.mxu0 %v1416
        %v1531 = vpop.f32.mrf.mxu0
        %v1532 = vadd.f32 %v1509, %v1531
        %1533 = vmatmul.f32.gmra.mxu0 %v1420
        %v1534 = vpop.f32.mrf.mxu0
        %v1535 = vadd.f32 %v1512, %v1534
        %1536 = vdwg.mxu0
        %1537 = vmatpush.msra.mxu0 %v1470
        %1538 = vmatpush.msra.mxu0 %v1469
        %1539 = vmatpush.msra.mxu0 %v1468
        %1540 = vmatpush.msra.mxu0 %v1467
        %1541 = vmatpush.msra.mxu0 %v1466
        %1542 = vmatpush.msra.mxu0 %v1465
        %1543 = vmatpush.msra.mxu0 %v1464
        %1544 = vmatpush.msra.mxu0 %v1463
        %1545 = vmatpush.msra.mxu0 %v1462
        %1546 = vmatpush.msra.mxu0 %v1461
        %1547 = vmatpush.msra.mxu0 %v1460
        %1548 = vmatpush.msra.mxu0 %v1459
        %1549 = vmatpush.msra.mxu0 %v1458
        %1550 = vmatpush.msra.mxu0 %v1457
        %1551 = vmatpush.msra.mxu0 %v1456
        %1552 = vmatpush.msra.mxu0 %v1455
        %1553 = vmatmul.f32.gmra.mxu0 %v1417
        %v1554 = vpop.f32.mrf.mxu0
        %v1555 = vadd.f32 %v1532, %v1554
        %1556 = vmatmul.f32.gmra.mxu0 %v1421
        %v1557 = vpop.f32.mrf.mxu0
        %v1558 = vadd.f32 %v1535, %v1557
        %1559 = vdwg.mxu0
        %1560 = vmatpush.msra.mxu0 0.0
        %1561 = vmatpush.msra.mxu0 0.0
        %1562 = vmatpush.msra.mxu0 0.0
        %1563 = vmatpush.msra.mxu0 0.0
        %1564 = vmatpush.msra.mxu0 %v1482
        %1565 = vmatpush.msra.mxu0 %v1481
        %1566 = vmatpush.msra.mxu0 %v1480
        %1567 = vmatpush.msra.mxu0 %v1479
        %1568 = vmatpush.msra.mxu0 %v1478
        %1569 = vmatpush.msra.mxu0 %v1477
        %1570 = vmatpush.msra.mxu0 %v1476
        %1571 = vmatpush.msra.mxu0 %v1475
        %1572 = vmatpush.msra.mxu0 %v1474
        %1573 = vmatpush.msra.mxu0 %v1473
        %1574 = vmatpush.msra.mxu0 %v1472
        %1575 = vmatpush.msra.mxu0 %v1471
        %1576 = vmatmul.f32.gmra.mxu0 %v1486
        %v1577 = vpop.f32.mrf.mxu0
        %v1578 = vadd.f32 %v1555, %v1577
        %1579 = vmatmul.f32.gmra.mxu0 %v1489
        %v1580 = vpop.f32.mrf.mxu0
        %v1581 = vadd.f32 %v1558, %v1580
        %1582 = vdwg.mxu0
        %v1583 = vmax.f32 %v1578, 0.0
        %v1584 = vmax.f32 %v1581, 0.0
        %vm1585 = vcmask 130048
        %1586 = vst.msk [vmem:[%s242] sm:$0xff] %vm1585, %v1583
        %1587 = vst.msk [vmem:[%s242 + $0x8] sm:$0xff] %vm1585, %v1584
        %s1588 = sand.u32 %s154, 1
        %s1589 = scalar_lea.sflag [#allocation4], %s1588
        %s1590 = sand.u32 %s154, 1
        %s1591 = smul.addr %s1590, 16
        %s1592 = scalar_lea.vmem [#allocation3], %s1591
        // Predicated region
        $region41: #{mcnn_forward.1} parent=39 // pred_check
          %p1593 = pneg %p164
        $region42: #{mcnn_forward.1} parent=39 // pred_check_branch
          %1595 = sbr.rel (%p1593) target = $region44
        $region43: #{mcnn_forward.1} parent=39 // pred_region
          %1597 = vsyncadd %s1589, 0
          %s1598 = smul.addr %s25, 2
          %s1599 = smul.addr %s24, 2
          %s1600 = sadd.s32 %s1598, %s1599
          %s1601 = smul.addr %s1600, 8
          %s1602 = scalar_lea.hbm %s5, %s1601
          %s1603 = sshll.u32 %s1592, 4
          %s1604 = int_to_ptr.vmem [resolvable:$true] %s1603
          %s1605 = sshll.u32 %s1602, 4
          %s1606 = int_to_ptr.hbm [resolvable:$true] %s1605
          %1611 = dma.vmem_to_hbm [thread:$0]  %s1604, 256, %s1606, %s1589, 128, 128, 8
        $region44: #{mcnn_forward.1} parent=39 // pred_fallthru
          _
      $region40: #{mcnn_forward.1} parent=5 // pred_fallthru
        _
      %p1612 = scmp.le.s32.totalorder 2, %s15
      // Predicated region
      $region45: #{mcnn_forward.1} parent=5 // pred_check
        %p1613 = pneg %p1612
      $region46: #{mcnn_forward.1} parent=5 // pred_check_branch
        %1615 = sbr.rel (%p1613) target = $region48
      $region47: #{mcnn_forward.1} parent=5 // pred_region
        %s1616 = ssub.s32 %s15, 2
        // Predicated region
        $region49: #{mcnn_forward.1} parent=47 // pred_check
          %p1617 = pneg %p170
        $region50: #{mcnn_forward.1} parent=47 // pred_check_branch
          %1619 = sbr.rel (%p1617) target = $region52
        $region51: #{mcnn_forward.1} parent=47 // pred_region
          %s1620 = sand.u32 %s155, 1
          %s1621 = scalar_lea.sflag [#allocation4], %s1620
          %s1622 = sand.u32 %s155, 1
          %s1623 = smul.addr %s1622, 16
          %s1624 = scalar_lea.vmem [#allocation3], %s1623
          %1626 = dma.done %s1621, 256
        $region52: #{mcnn_forward.1} parent=47 // pred_fallthru
          _
      $region48: #{mcnn_forward.1} parent=5 // pred_fallthru
        _
    $region6: #{mcnn_forward.1} parent=1 // loop_footer
      %s19 = sadd.s32 1, %s15
    $region7: #{mcnn_forward.1} parent=1 // loop_footer_branch
      %14 = sbr.rel target = $region3
    $region8: #{mcnn_forward.1} parent=1 // loop_exit
      _
    %1627 = vsyncpa [#allocation4], 1
    %s1628 = scalar_lea.sflag [#allocation4], 1
    %1629 = vsyncpa %s1628, 1

</llo_original>
